<compile_context>
chip_gen: v6e
topology: v6e:2x2x1
jax: 0.10.0
libtpu: 0.0.40
codegen_flags: <defaults>
</compile_context>

<pallas_src>
import functools

import jax
import jax.numpy as jnp
from jax import lax
from jax.experimental import pallas as pl
from jax.experimental.pallas import tpu as pltpu

BN_EPS = 1e-5


def _round_up(a, m):
    return -(-a // m) * m


# ------------------------------ Pallas kernel ------------------------------ #

def _basic_block_kernel(xs_ref, w1_ref, s1_ref, b1_ref,
                        w2_ref, s2_ref, b2_ref, *rest,
                        T, Ho, Wo, Wk, Cin, id_off, has_ds):
    """Fully fused BasicBlock for one image.

    xs_ref : (Nx, Cp)         flat, zero-padded, space-to-depth packed input (bf16)
    w1_ref : (T*T, Cp, Cout)  packed conv1 weights (bf16)
    w2_ref : (9, Cout, Cout)  conv2 weights (bf16)
    s*_ref / b*_ref : (1, Cout) folded BatchNorm scale / bias (f32)
    [wds_ref : (Cin, Cout), sds_ref, bds_ref]   optional downsample path
    o_ref  : (Ho*Wk, Cout)    flat block output (garbage cols u>=Wo dropped in wrapper)
    mid_ref: (Nm, Cout)       VMEM scratch, flat zero-bordered conv1 output (bf16)
    """
    if has_ds:
        wds_ref, sds_ref, bds_ref, o_ref, mid_ref = rest
    else:
        o_ref, mid_ref = rest

    Cout = o_ref.shape[-1]
    L = Ho * Wk                        # flat rows per conv output
    Nm = mid_ref.shape[0]

    # Column-validity mask for the Wk-strided flat rows (u >= Wo is garbage
    # produced by the wrap-around of the flat tap windows).
    col = lax.broadcasted_iota(jnp.int32, (L, 1), 0) % Wk
    valid = col < Wo

    # ---- conv1 (+ bn1 + relu): contiguous flat tap windows over the ref ----
    acc1 = jnp.zeros((L, Cout), jnp.float32)
    for tv in range(T):
        for tu in range(T):
            off = tv * Wk + tu
            acc1 = acc1 + jnp.dot(xs_ref[off:off + L, :],
                                  w1_ref[tv * T + tu],
                                  preferred_element_type=jnp.float32)
    y1 = jnp.maximum(acc1 * s1_ref[...] + b1_ref[...], 0.0)
    # Zero the garbage columns: they land exactly on the conv2 zero border
    # when y1 is written into the mid scratch below.
    y1 = jnp.where(valid, y1, 0.0)

    # ---- shortcut: identity or 1x1 downsample (+ bn), same flat window ----
    dv, du = id_off
    ioff = dv * Wk + du
    if has_ds:
        # Identity channel block was permuted to the front -> K = Cin only.
        idp = xs_ref[ioff:ioff + L, 0:Cin]
        ident = jnp.dot(idp, wds_ref[...], preferred_element_type=jnp.float32)
        ident = ident * sds_ref[...] + bds_ref[...]
    else:
        ident = xs_ref[ioff:ioff + L, :].astype(jnp.float32)

    # ---- stash conv1 output into the flat, zero-bordered VMEM scratch ----
    # Only the two tiny strips not covered by the (masked) interior write need
    # zeroing; everything else is rewritten every step.
    head = Wk + 1
    tail = head + L
    mid_ref[0:head, :] = jnp.zeros((head, Cout), mid_ref.dtype)
    mid_ref[tail:Nm, :] = jnp.zeros((Nm - tail, Cout), mid_ref.dtype)
    mid_ref[head:tail, :] = y1.astype(mid_ref.dtype)

    # ---- conv2 (+ bn2) + residual add + relu: taps sliced from the ref ----
    acc2 = jnp.zeros((L, Cout), jnp.float32)
    for kh in range(3):
        for kw in range(3):
            off = kh * Wk + kw
            acc2 = acc2 + jnp.dot(mid_ref[off:off + L, :],
                                  w2_ref[kh * 3 + kw],
                                  preferred_element_type=jnp.float32)
    y2 = jnp.maximum(acc2 * s2_ref[...] + b2_ref[...] + ident, 0.0)
    o_ref[...] = y2.astype(o_ref.dtype)


# -------------------------- packing / folding helpers ----------------------- #

def _bn_fold(bn_params):
    gamma, beta, mean, var = bn_params
    scale = gamma / jnp.sqrt(var + BN_EPS)
    bias = beta - mean * scale
    return (scale.reshape(1, -1).astype(jnp.float32),
            bias.reshape(1, -1).astype(jnp.float32))


def _block_perm(stride):
    """Channel-block order for space-to-depth: identity block first."""
    s = stride
    blk = (1 % s) * s + (1 % s)
    return [blk] + [b for b in range(s * s) if b != blk]


def _pack_input(x_nhwc, s, Hpad, Wpad, Wk, Nx, perm):
    """pad -> space-to-depth (block-permuted) -> pad width to Wk -> flatten
    rows -> pad rows to Nx.  One fused XLA copy; output bf16."""
    N, H, W, C = x_nhwc.shape
    xp = jnp.pad(x_nhwc, ((0, 0), (1, Hpad - 1 - H), (1, Wpad - 1 - W), (0, 0)))
    Hp, Wp = Hpad // s, Wpad // s
    xs = xp.reshape(N, Hp, s, Wp, s, C).transpose(0, 1, 3, 2, 4, 5)
    xs = xs.reshape(N, Hp, Wp, s * s, C)
    if s > 1:
        xs = jnp.take(xs, jnp.asarray(perm, dtype=jnp.int32), axis=3)
    xs = xs.reshape(N, Hp, Wp, s * s * C)
    xs = jnp.pad(xs, ((0, 0), (0, 0), (0, Wk - Wp), (0, 0)))
    xs = xs.reshape(N, Hp * Wk, s * s * C)
    xs = jnp.pad(xs, ((0, 0), (0, Nx - Hp * Wk), (0, 0)))
    return xs.astype(jnp.bfloat16)


def _pack_conv1_weight(w_hwio, stride, perm):
    """(3,3,Cin,Cout) -> (T*T, s*s*Cin, Cout), matching the packed input."""
    s = stride
    Cin, Cout = w_hwio.shape[2], w_hwio.shape[3]
    T = (3 - 1) // s + 1
    slot = {b: i for i, b in enumerate(perm)}
    wp = jnp.zeros((T, T, s * s, Cin, Cout), w_hwio.dtype)
    for kh in range(3):
        for kw in range(3):
            b = (kh % s) * s + (kw % s)
            wp = wp.at[kh // s, kw // s, slot[b]].set(w_hwio[kh, kw])
    return wp.reshape(T * T, s * s * Cin, Cout)


def _pick_vmem_limit(kernel_bytes):
    """Per-generation scoped-VMEM limit: generous on v5e/v6e, bounded on v7x."""
    try:
        info = pltpu.get_tpu_info()
        cap = int(getattr(info, "vmem_capacity_bytes", 0)) or 64 * 1024 * 1024
    except Exception:
        cap = 64 * 1024 * 1024
    want = max(32 * 1024 * 1024, 2 * int(kernel_bytes))
    return int(min(want, (cap * 3) // 4))


# --------------------------------- wrapper ---------------------------------- #

def basic_block_forward(x_nchw, params, stride, out_dtype=jnp.float32):
    """Forward pass of BasicBlock.  Input/output: NCHW (PyTorch convention)."""
    x = jnp.transpose(x_nchw, (0, 2, 3, 1)).astype(jnp.float32)      # NHWC
    N, H, W, Cin = x.shape
    Cout = params["w1"].shape[-1]
    s = stride

    # Geometry (all static Python ints).
    Ho = (H - 1) // s + 1
    Wo = (W - 1) // s + 1
    T = (3 - 1) // s + 1                     # packed taps per spatial dim
    Cp = s * s * Cin
    Wk = Wo + 2                              # common flat-plane row stride
    Hpad = _round_up(H + 2, s)
    Wpad = _round_up(W + 2, s)
    Hp, Wp = Hpad // s, Wpad // s
    assert Wp <= Wk
    Nx = _round_up(max(Hp * Wk, (Ho + T - 1) * Wk + (T - 1)), 8)
    Nm = _round_up((Ho + 2) * Wk + 2, 8)
    L = Ho * Wk

    perm = _block_perm(s)
    # Single HBM pass over the input: pad + s2d + flatten + cast to bf16.
    xs = _pack_input(x, s, Hpad, Wpad, Wk, Nx, perm)

    w1p = _pack_conv1_weight(params["w1"], s, perm).astype(jnp.bfloat16)
    w2 = params["w2"].reshape(9, Cout, Cout).astype(jnp.bfloat16)
    s1, b1 = _bn_fold(params["bn1"])
    s2, b2 = _bn_fold(params["bn2"])

    has_ds = "w_ds" in params
    dv = du = 1 // s                         # identity tap offset in packed coords

    inputs = [xs, w1p, s1, b1, w2, s2, b2]
    in_specs = [
        pl.BlockSpec((None, Nx, Cp), lambda n: (n, 0, 0)),
        pl.BlockSpec((T * T, Cp, Cout), lambda n: (0, 0, 0)),
        pl.BlockSpec((1, Cout), lambda n: (0, 0)),
        pl.BlockSpec((1, Cout), lambda n: (0, 0)),
        pl.BlockSpec((9, Cout, Cout), lambda n: (0, 0, 0)),
        pl.BlockSpec((1, Cout), lambda n: (0, 0)),
        pl.BlockSpec((1, Cout), lambda n: (0, 0)),
    ]
    if has_ds:
        wds = params["w_ds"].astype(jnp.bfloat16)                 # (Cin, Cout)
        sds, bds = _bn_fold(params["bn_ds"])
        inputs += [wds, sds, bds]
        in_specs += [
            pl.BlockSpec((Cin, Cout), lambda n: (0, 0)),
            pl.BlockSpec((1, Cout), lambda n: (0, 0)),
            pl.BlockSpec((1, Cout), lambda n: (0, 0)),
        ]
    else:
        assert Cin == Cout and s == 1        # matches the PyTorch module's rule

    out_itemsize = jnp.dtype(out_dtype).itemsize
    est = (2 * (Nx * Cp * 2
                + (T * T * Cp * Cout + 9 * Cout * Cout + Cin * Cout) * 2
                + 6 * Cout * 4
                + L * Cout * out_itemsize)
           + Nm * Cout * 2
           + 6 * L * Cout * 4)               # live f32 accumulators / temps

    kernel = functools.partial(_basic_block_kernel, T=T, Ho=Ho, Wo=Wo, Wk=Wk,
                               Cin=Cin, id_off=(dv, du), has_ds=has_ds)
    out = pl.pallas_call(
        kernel,
        out_shape=jax.ShapeDtypeStruct((N, L, Cout), out_dtype),
        grid=(N,),
        in_specs=in_specs,
        out_specs=pl.BlockSpec((None, L, Cout), lambda n: (n, 0, 0)),
        scratch_shapes=[pltpu.VMEM((Nm, Cout), jnp.bfloat16)],
        compiler_params=pltpu.CompilerParams(
            dimension_semantics=("parallel",),
            vmem_limit_bytes=_pick_vmem_limit(est)),
    )(*inputs)

    # Drop the Wk-Wo garbage columns; XLA fuses the slice into the (anyway
    # required) NHWC->NCHW transpose, so this is not an extra HBM pass.
    out = out.reshape(N, Ho, Wk, Cout)[:, :, :Wo, :]
    return jnp.transpose(out, (0, 3, 1, 2))                          # NCHW


# ------------------------- params & pure-JAX reference ---------------------- #

def init_params(key, in_channels, out_channels, stride):
    ks = jax.random.split(key, 16)

    def bn_init(k0, k1, k2, k3, c):
        return (jax.random.uniform(k0, (c,), jnp.float32, 0.5, 1.5),   # gamma
                0.1 * jax.random.normal(k1, (c,), jnp.float32),        # beta
                0.1 * jax.random.normal(k2, (c,), jnp.float32),        # running_mean
                jax.random.uniform(k3, (c,), jnp.float32, 0.5, 1.5))   # running_var

    params = {
        "w1": 0.1 * jax.random.normal(ks[0], (3, 3, in_channels, out_channels),
                                      jnp.float32),
        "bn1": bn_init(ks[1], ks[2], ks[3], ks[4], out_channels),
        "w2": 0.1 * jax.random.normal(ks[5], (3, 3, out_channels, out_channels),
                                      jnp.float32),
        "bn2": bn_init(ks[6], ks[7], ks[8], ks[9], out_channels),
    }
    if in_channels != out_channels or stride != 1:
        params["w_ds"] = 0.1 * jax.random.normal(
            ks[10], (in_channels, out_channels), jnp.float32)
        params["bn_ds"] = bn_init(ks[11], ks[12], ks[13], ks[14], out_channels)
    return params


def reference_forward(x_nchw, params, stride):
    x = jnp.transpose(x_nchw, (0, 2, 3, 1)).astype(jnp.float32)
    dn = ("NHWC", "HWIO", "NHWC")

    def bn(y, bnp):
        g, b, m, v = bnp
        return (y - m) / jnp.sqrt(v + BN_EPS) * g + b

    out = lax.conv_general_dilated(x, params["w1"], (stride, stride),
                                   ((1, 1), (1, 1)), dimension_numbers=dn)
    out = jax.nn.relu(bn(out, params["bn1"]))
    out = lax.conv_general_dilated(out, params["w2"], (1, 1),
                                   ((1, 1), (1, 1)), dimension_numbers=dn)
    out = bn(out, params["bn2"])
    if "w_ds" in params:
        w_ds = params["w_ds"].reshape(1, 1, *params["w_ds"].shape)
        idn = lax.conv_general_dilated(x, w_ds, (stride, stride),
                                       ((0, 0), (0, 0)), dimension_numbers=dn)
        idn = bn(idn, params["bn_ds"])
    else:
        idn = x
    out = jax.nn.relu(out + idn)
    return jnp.transpose(out, (0, 3, 1, 2))


# ----------------------------------- main ----------------------------------- #

if __name__ == "__main__":
    key = jax.random.PRNGKey(0)
    k_x, k_p, k_x2, k_p2 = jax.random.split(key, 4)

    # Config 1: stride-2 block with channel expansion (downsample path).
    N, Cin, Cout, H, W, stride = 2, 4, 8, 16, 16, 2
    x = jax.random.normal(k_x, (N, Cin, H, W), jnp.float32)          # NCHW
    params = init_params(k_p, Cin, Cout, stride)
    fwd = jax.jit(functools.partial(basic_block_forward, stride=stride))
    out = jax.block_until_ready(fwd(x, params))
    ref = jax.block_until_ready(reference_forward(x, params, stride))
    assert out.shape == (N, Cout, H // stride, W // stride), out.shape
    tol = 2e-2 * (1.0 + float(jnp.max(jnp.abs(ref))))    # bf16 matmul tolerance
    err = float(jnp.max(jnp.abs(out - ref)))
    assert err < tol, f"stride-2 mismatch vs reference: {err} (tol {tol})"

    # Config 2: stride-1 block, equal channels (pure identity shortcut).
    C, Hs, Ws = 8, 16, 16
    x1 = jax.random.normal(k_x2, (N, C, Hs, Ws), jnp.float32)
    params1 = init_params(k_p2, C, C, 1)
    fwd1 = jax.jit(functools.partial(basic_block_forward, stride=1))
    out1 = jax.block_until_ready(fwd1(x1, params1))
    ref1 = jax.block_until_ready(reference_forward(x1, params1, 1))
    assert out1.shape == (N, C, Hs, Ws), out1.shape
    tol1 = 2e-2 * (1.0 + float(jnp.max(jnp.abs(ref1))))
    err1 = float(jnp.max(jnp.abs(out1 - ref1)))
    assert err1 < tol1, f"stride-1 mismatch vs reference: {err1} (tol {tol1})"

    print("KERNEL_OK")
</pallas_src>

<mosaic_0001>
module attributes {stable_mosaic.version = 11 : i64} {
  func.func @_basic_block_kernel(%arg0: i32, %arg1: memref<1x96x16xbf16, #tpu.memory_space<vmem>>, %arg2: memref<4x16x8xbf16, #tpu.memory_space<vmem>>, %arg3: memref<1x8xf32, #tpu.memory_space<vmem>>, %arg4: memref<1x8xf32, #tpu.memory_space<vmem>>, %arg5: memref<9x8x8xbf16, #tpu.memory_space<vmem>>, %arg6: memref<1x8xf32, #tpu.memory_space<vmem>>, %arg7: memref<1x8xf32, #tpu.memory_space<vmem>>, %arg8: memref<4x8xbf16, #tpu.memory_space<vmem>>, %arg9: memref<1x8xf32, #tpu.memory_space<vmem>>, %arg10: memref<1x8xf32, #tpu.memory_space<vmem>>, %arg11: memref<1x80x8xf32, #tpu.memory_space<vmem>>, %arg12: memref<104x8xbf16, #tpu.memory_space<vmem>>) attributes {dimension_semantics = [#tpu.dimension_semantics<parallel>], iteration_bounds = array<i64: 2>, scalar_prefetch = 0 : i64, scratch_operands = 1 : i64, tpu.core_type = #tpu.core_type<tc>, window_params = [{transform_indices = @transform_0, window_bounds = array<i64: 1, 96, 16>}, {pipeline_mode = #tpu.pipeline_mode<synchronous>, transform_indices = @transform_1, window_bounds = array<i64: 4, 16, 8>}, {pipeline_mode = #tpu.pipeline_mode<synchronous>, transform_indices = @transform_2, window_bounds = array<i64: 1, 8>}, {pipeline_mode = #tpu.pipeline_mode<synchronous>, transform_indices = @transform_3, window_bounds = array<i64: 1, 8>}, {pipeline_mode = #tpu.pipeline_mode<synchronous>, transform_indices = @transform_4, window_bounds = array<i64: 9, 8, 8>}, {pipeline_mode = #tpu.pipeline_mode<synchronous>, transform_indices = @transform_5, window_bounds = array<i64: 1, 8>}, {pipeline_mode = #tpu.pipeline_mode<synchronous>, transform_indices = @transform_6, window_bounds = array<i64: 1, 8>}, {pipeline_mode = #tpu.pipeline_mode<synchronous>, transform_indices = @transform_7, window_bounds = array<i64: 4, 8>}, {pipeline_mode = #tpu.pipeline_mode<synchronous>, transform_indices = @transform_8, window_bounds = array<i64: 1, 8>}, {pipeline_mode = #tpu.pipeline_mode<synchronous>, transform_indices = @transform_9, window_bounds = array<i64: 1, 8>}, {transform_indices = @transform_10, window_bounds = array<i64: 1, 80, 8>}]} {
    %0 = tpu.iota {dimensions = array<i32: 0>} : vector<80x1xi32>
    %c10_i32 = arith.constant 10 : i32
    %c0_i32 = arith.constant 0 : i32
    %1 = arith.cmpi eq, %c10_i32, %c0_i32 : i32
    %c1_i32 = arith.constant 1 : i32
    %2 = arith.select %1, %c1_i32, %c10_i32 : i32
    %3 = vector.broadcast %2 : i32 to vector<80x1xi32>
    %4 = arith.remsi %0, %3 : vector<80x1xi32>
    %c0_i32_0 = arith.constant 0 : i32
    %5 = vector.broadcast %c0_i32_0 : i32 to vector<80x1xi32>
    %6 = arith.cmpi ne, %4, %5 : vector<80x1xi32>
    %c0_i32_1 = arith.constant 0 : i32
    %7 = vector.broadcast %c0_i32_1 : i32 to vector<80x1xi32>
    %8 = arith.cmpi slt, %4, %7 : vector<80x1xi32>
    %c0_i32_2 = arith.constant 0 : i32
    %9 = arith.cmpi slt, %2, %c0_i32_2 : i32
    %10 = vector.broadcast %9 : i1 to vector<80x1xi1>
    %11 = vector.broadcast %10 : vector<80x1xi1> to vector<80x1xi1>
    %12 = arith.xori %8, %11 : vector<80x1xi1>
    %13 = arith.andi %12, %6 : vector<80x1xi1>
    %14 = vector.broadcast %2 : i32 to vector<80x1xi32>
    %15 = arith.addi %4, %14 : vector<80x1xi32>
    %16 = arith.select %13, %15, %4 : vector<80x1xi1>, vector<80x1xi32>
    %c8_i32 = arith.constant 8 : i32
    %17 = vector.broadcast %c8_i32 : i32 to vector<80x1xi32>
    %18 = arith.cmpi slt, %16, %17 : vector<80x1xi32>
    %cst = arith.constant 0.000000e+00 : f32
    %19 = vector.broadcast %cst : f32 to vector<80x8xf32>
    %c0 = arith.constant 0 : index
    %c0_3 = arith.constant 0 : index
    %c0_4 = arith.constant 0 : index
    %20 = vector.load %arg1[%c0, %c0_3, %c0_4] : memref<1x96x16xbf16, #tpu.memory_space<vmem>>, vector<1x80x16xbf16>
    %21 = vector.shape_cast %20 : vector<1x80x16xbf16> to vector<80x16xbf16>
    %c0_5 = arith.constant 0 : index
    %c0_6 = arith.constant 0 : index
    %c0_7 = arith.constant 0 : index
    %22 = vector.load %arg2[%c0_5, %c0_6, %c0_7] : memref<4x16x8xbf16, #tpu.memory_space<vmem>>, vector<1x16x8xbf16>
    %23 = vector.shape_cast %22 : vector<1x16x8xbf16> to vector<16x8xbf16>
    %cst_8 = arith.constant dense<0.000000e+00> : vector<80x8xf32>
    %24 = tpu.matmul %21, %23, %cst_8 {dimension_numbers = #tpu.dot_dimension_numbers<[1], [0], [0], [1], [0, 0, 1, 1], [], []>} : vector<80x16xbf16>, vector<16x8xbf16>, vector<80x8xf32> -> vector<80x8xf32>
    %25 = arith.addf %19, %24 : vector<80x8xf32>
    %c0_9 = arith.constant 0 : index
    %c1 = arith.constant 1 : index
    %c0_10 = arith.constant 0 : index
    %26 = vector.load %arg1[%c0_9, %c1, %c0_10] : memref<1x96x16xbf16, #tpu.memory_space<vmem>>, vector<1x80x16xbf16>
    %27 = vector.shape_cast %26 : vector<1x80x16xbf16> to vector<80x16xbf16>
    %c1_11 = arith.constant 1 : index
    %c0_12 = arith.constant 0 : index
    %c0_13 = arith.constant 0 : index
    %28 = vector.load %arg2[%c1_11, %c0_12, %c0_13] : memref<4x16x8xbf16, #tpu.memory_space<vmem>>, vector<1x16x8xbf16>
    %29 = vector.shape_cast %28 : vector<1x16x8xbf16> to vector<16x8xbf16>
    %cst_14 = arith.constant dense<0.000000e+00> : vector<80x8xf32>
    %30 = tpu.matmul %27, %29, %cst_14 {dimension_numbers = #tpu.dot_dimension_numbers<[1], [0], [0], [1], [0, 0, 1, 1], [], []>} : vector<80x16xbf16>, vector<16x8xbf16>, vector<80x8xf32> -> vector<80x8xf32>
    %31 = arith.addf %25, %30 : vector<80x8xf32>
    %c0_15 = arith.constant 0 : index
    %c10 = arith.constant 10 : index
    %c0_16 = arith.constant 0 : index
    %32 = vector.load %arg1[%c0_15, %c10, %c0_16] : memref<1x96x16xbf16, #tpu.memory_space<vmem>>, vector<1x80x16xbf16>
    %33 = vector.shape_cast %32 : vector<1x80x16xbf16> to vector<80x16xbf16>
    %c2 = arith.constant 2 : index
    %c0_17 = arith.constant 0 : index
    %c0_18 = arith.constant 0 : index
    %34 = vector.load %arg2[%c2, %c0_17, %c0_18] : memref<4x16x8xbf16, #tpu.memory_space<vmem>>, vector<1x16x8xbf16>
    %35 = vector.shape_cast %34 : vector<1x16x8xbf16> to vector<16x8xbf16>
    %cst_19 = arith.constant dense<0.000000e+00> : vector<80x8xf32>
    %36 = tpu.matmul %33, %35, %cst_19 {dimension_numbers = #tpu.dot_dimension_numbers<[1], [0], [0], [1], [0, 0, 1, 1], [], []>} : vector<80x16xbf16>, vector<16x8xbf16>, vector<80x8xf32> -> vector<80x8xf32>
    %37 = arith.addf %31, %36 : vector<80x8xf32>
    %c0_20 = arith.constant 0 : index
    %c11 = arith.constant 11 : index
    %c0_21 = arith.constant 0 : index
    %38 = vector.load %arg1[%c0_20, %c11, %c0_21] : memref<1x96x16xbf16, #tpu.memory_space<vmem>>, vector<1x80x16xbf16>
    %39 = vector.shape_cast %38 : vector<1x80x16xbf16> to vector<80x16xbf16>
    %c3 = arith.constant 3 : index
    %c0_22 = arith.constant 0 : index
    %c0_23 = arith.constant 0 : index
    %40 = vector.load %arg2[%c3, %c0_22, %c0_23] : memref<4x16x8xbf16, #tpu.memory_space<vmem>>, vector<1x16x8xbf16>
    %41 = vector.shape_cast %40 : vector<1x16x8xbf16> to vector<16x8xbf16>
    %cst_24 = arith.constant dense<0.000000e+00> : vector<80x8xf32>
    %42 = tpu.matmul %39, %41, %cst_24 {dimension_numbers = #tpu.dot_dimension_numbers<[1], [0], [0], [1], [0, 0, 1, 1], [], []>} : vector<80x16xbf16>, vector<16x8xbf16>, vector<80x8xf32> -> vector<80x8xf32>
    %43 = arith.addf %37, %42 : vector<80x8xf32>
    %c0_25 = arith.constant 0 : index
    %c0_26 = arith.constant 0 : index
    %44 = vector.load %arg3[%c0_25, %c0_26] : memref<1x8xf32, #tpu.memory_space<vmem>>, vector<1x8xf32>
    %45 = vector.broadcast %44 : vector<1x8xf32> to vector<80x8xf32>
    %46 = arith.mulf %43, %45 : vector<80x8xf32>
    %c0_27 = arith.constant 0 : index
    %c0_28 = arith.constant 0 : index
    %47 = vector.load %arg4[%c0_27, %c0_28] : memref<1x8xf32, #tpu.memory_space<vmem>>, vector<1x8xf32>
    %48 = vector.broadcast %47 : vector<1x8xf32> to vector<80x8xf32>
    %49 = arith.addf %46, %48 : vector<80x8xf32>
    %cst_29 = arith.constant 0.000000e+00 : f32
    %50 = vector.broadcast %cst_29 : f32 to vector<80x8xf32>
    %51 = arith.maximumf %49, %50 : vector<80x8xf32>
    %cst_30 = arith.constant 0.000000e+00 : f32
    %52 = vector.shape_cast %18 : vector<80x1xi1> to vector<80x1xi1>
    %53 = vector.broadcast %52 : vector<80x1xi1> to vector<80x8xi1>
    %54 = vector.broadcast %cst_30 : f32 to vector<80x8xf32>
    %55 = arith.select %53, %51, %54 : vector<80x8xi1>, vector<80x8xf32>
    %c0_31 = arith.constant 0 : index
    %c0_32 = arith.constant 0 : index
    %c0_33 = arith.constant 0 : index
    %56 = vector.load %arg1[%c0_31, %c0_32, %c0_33] : memref<1x96x16xbf16, #tpu.memory_space<vmem>>, vector<1x80x4xbf16>
    %57 = vector.shape_cast %56 : vector<1x80x4xbf16> to vector<80x4xbf16>
    %c0_34 = arith.constant 0 : index
    %c0_35 = arith.constant 0 : index
    %58 = vector.load %arg8[%c0_34, %c0_35] : memref<4x8xbf16, #tpu.memory_space<vmem>>, vector<4x8xbf16>
    %cst_36 = arith.constant dense<0.000000e+00> : vector<80x8xf32>
    %59 = tpu.matmul %57, %58, %cst_36 {dimension_numbers = #tpu.dot_dimension_numbers<[1], [0], [0], [1], [0, 0, 1, 1], [], []>} : vector<80x4xbf16>, vector<4x8xbf16>, vector<80x8xf32> -> vector<80x8xf32>
    %c0_37 = arith.constant 0 : index
    %c0_38 = arith.constant 0 : index
    %60 = vector.load %arg9[%c0_37, %c0_38] : memref<1x8xf32, #tpu.memory_space<vmem>>, vector<1x8xf32>
    %61 = vector.broadcast %60 : vector<1x8xf32> to vector<80x8xf32>
    %62 = arith.mulf %59, %61 : vector<80x8xf32>
    %c0_39 = arith.constant 0 : index
    %c0_40 = arith.constant 0 : index
    %63 = vector.load %arg10[%c0_39, %c0_40] : memref<1x8xf32, #tpu.memory_space<vmem>>, vector<1x8xf32>
    %64 = vector.broadcast %63 : vector<1x8xf32> to vector<80x8xf32>
    %65 = arith.addf %62, %64 : vector<80x8xf32>
    %cst_41 = arith.constant 0.000000e+00 : bf16
    %66 = vector.broadcast %cst_41 : bf16 to vector<11x8xbf16>
    %c0_42 = arith.constant 0 : index
    %c0_43 = arith.constant 0 : index
    %67 = vector.load %arg12[%c0_42, %c0_43] : memref<104x8xbf16, #tpu.memory_space<vmem>>, vector<11x8xbf16>
    tpu.vector_store %arg12[%c0_42, %c0_43], %66 {strides = array<i32>} : memref<104x8xbf16, #tpu.memory_space<vmem>>, vector<11x8xbf16>,
    %cst_44 = arith.constant 0.000000e+00 : bf16
    %68 = vector.broadcast %cst_44 : bf16 to vector<13x8xbf16>
    %c91 = arith.constant 91 : index
    %c0_45 = arith.constant 0 : index
    %69 = vector.load %arg12[%c91, %c0_45] : memref<104x8xbf16, #tpu.memory_space<vmem>>, vector<13x8xbf16>
    tpu.vector_store %arg12[%c91, %c0_45], %68 {strides = array<i32>} : memref<104x8xbf16, #tpu.memory_space<vmem>>, vector<13x8xbf16>,
    %70 = arith.truncf %55 : vector<80x8xf32> to vector<80x8xbf16>
    %c11_46 = arith.constant 11 : index
    %c0_47 = arith.constant 0 : index
    %71 = vector.load %arg12[%c11_46, %c0_47] : memref<104x8xbf16, #tpu.memory_space<vmem>>, vector<80x8xbf16>
    tpu.vector_store %arg12[%c11_46, %c0_47], %70 {strides = array<i32>} : memref<104x8xbf16, #tpu.memory_space<vmem>>, vector<80x8xbf16>,
    %cst_48 = arith.constant 0.000000e+00 : f32
    %72 = vector.broadcast %cst_48 : f32 to vector<80x8xf32>
    %c0_49 = arith.constant 0 : index
    %c0_50 = arith.constant 0 : index
    %73 = vector.load %arg12[%c0_49, %c0_50] : memref<104x8xbf16, #tpu.memory_space<vmem>>, vector<80x8xbf16>
    %c0_51 = arith.constant 0 : index
    %c0_52 = arith.constant 0 : index
    %c0_53 = arith.constant 0 : index
    %74 = vector.load %arg5[%c0_51, %c0_52, %c0_53] : memref<9x8x8xbf16, #tpu.memory_space<vmem>>, vector<1x8x8xbf16>
    %75 = vector.shape_cast %74 : vector<1x8x8xbf16> to vector<8x8xbf16>
    %cst_54 = arith.constant dense<0.000000e+00> : vector<80x8xf32>
    %76 = tpu.matmul %73, %75, %cst_54 {dimension_numbers = #tpu.dot_dimension_numbers<[1], [0], [0], [1], [0, 0, 1, 1], [], []>} : vector<80x8xbf16>, vector<8x8xbf16>, vector<80x8xf32> -> vector<80x8xf32>
    %77 = arith.addf %72, %76 : vector<80x8xf32>
    %c1_55 = arith.constant 1 : index
    %c0_56 = arith.constant 0 : index
    %78 = vector.load %arg12[%c1_55, %c0_56] : memref<104x8xbf16, #tpu.memory_space<vmem>>, vector<80x8xbf16>
    %c1_57 = arith.constant 1 : index
    %c0_58 = arith.constant 0 : index
    %c0_59 = arith.constant 0 : index
    %79 = vector.load %arg5[%c1_57, %c0_58, %c0_59] : memref<9x8x8xbf16, #tpu.memory_space<vmem>>, vector<1x8x8xbf16>
    %80 = vector.shape_cast %79 : vector<1x8x8xbf16> to vector<8x8xbf16>
    %cst_60 = arith.constant dense<0.000000e+00> : vector<80x8xf32>
    %81 = tpu.matmul %78, %80, %cst_60 {dimension_numbers = #tpu.dot_dimension_numbers<[1], [0], [0], [1], [0, 0, 1, 1], [], []>} : vector<80x8xbf16>, vector<8x8xbf16>, vector<80x8xf32> -> vector<80x8xf32>
    %82 = arith.addf %77, %81 : vector<80x8xf32>
    %c2_61 = arith.constant 2 : index
    %c0_62 = arith.constant 0 : index
    %83 = vector.load %arg12[%c2_61, %c0_62] : memref<104x8xbf16, #tpu.memory_space<vmem>>, vector<80x8xbf16>
    %c2_63 = arith.constant 2 : index
    %c0_64 = arith.constant 0 : index
    %c0_65 = arith.constant 0 : index
    %84 = vector.load %arg5[%c2_63, %c0_64, %c0_65] : memref<9x8x8xbf16, #tpu.memory_space<vmem>>, vector<1x8x8xbf16>
    %85 = vector.shape_cast %84 : vector<1x8x8xbf16> to vector<8x8xbf16>
    %cst_66 = arith.constant dense<0.000000e+00> : vector<80x8xf32>
    %86 = tpu.matmul %83, %85, %cst_66 {dimension_numbers = #tpu.dot_dimension_numbers<[1], [0], [0], [1], [0, 0, 1, 1], [], []>} : vector<80x8xbf16>, vector<8x8xbf16>, vector<80x8xf32> -> vector<80x8xf32>
    %87 = arith.addf %82, %86 : vector<80x8xf32>
    %c10_67 = arith.constant 10 : index
    %c0_68 = arith.constant 0 : index
    %88 = vector.load %arg12[%c10_67, %c0_68] : memref<104x8xbf16, #tpu.memory_space<vmem>>, vector<80x8xbf16>
    %c3_69 = arith.constant 3 : index
    %c0_70 = arith.constant 0 : index
    %c0_71 = arith.constant 0 : index
    %89 = vector.load %arg5[%c3_69, %c0_70, %c0_71] : memref<9x8x8xbf16, #tpu.memory_space<vmem>>, vector<1x8x8xbf16>
    %90 = vector.shape_cast %89 : vector<1x8x8xbf16> to vector<8x8xbf16>
    %cst_72 = arith.constant dense<0.000000e+00> : vector<80x8xf32>
    %91 = tpu.matmul %88, %90, %cst_72 {dimension_numbers = #tpu.dot_dimension_numbers<[1], [0], [0], [1], [0, 0, 1, 1], [], []>} : vector<80x8xbf16>, vector<8x8xbf16>, vector<80x8xf32> -> vector<80x8xf32>
    %92 = arith.addf %87, %91 : vector<80x8xf32>
    %c11_73 = arith.constant 11 : index
    %c0_74 = arith.constant 0 : index
    %93 = vector.load %arg12[%c11_73, %c0_74] : memref<104x8xbf16, #tpu.memory_space<vmem>>, vector<80x8xbf16>
    %c4 = arith.constant 4 : index
    %c0_75 = arith.constant 0 : index
    %c0_76 = arith.constant 0 : index
    %94 = vector.load %arg5[%c4, %c0_75, %c0_76] : memref<9x8x8xbf16, #tpu.memory_space<vmem>>, vector<1x8x8xbf16>
    %95 = vector.shape_cast %94 : vector<1x8x8xbf16> to vector<8x8xbf16>
    %cst_77 = arith.constant dense<0.000000e+00> : vector<80x8xf32>
    %96 = tpu.matmul %93, %95, %cst_77 {dimension_numbers = #tpu.dot_dimension_numbers<[1], [0], [0], [1], [0, 0, 1, 1], [], []>} : vector<80x8xbf16>, vector<8x8xbf16>, vector<80x8xf32> -> vector<80x8xf32>
    %97 = arith.addf %92, %96 : vector<80x8xf32>
    %c12 = arith.constant 12 : index
    %c0_78 = arith.constant 0 : index
    %98 = vector.load %arg12[%c12, %c0_78] : memref<104x8xbf16, #tpu.memory_space<vmem>>, vector<80x8xbf16>
    %c5 = arith.constant 5 : index
    %c0_79 = arith.constant 0 : index
    %c0_80 = arith.constant 0 : index
    %99 = vector.load %arg5[%c5, %c0_79, %c0_80] : memref<9x8x8xbf16, #tpu.memory_space<vmem>>, vector<1x8x8xbf16>
    %100 = vector.shape_cast %99 : vector<1x8x8xbf16> to vector<8x8xbf16>
    %cst_81 = arith.constant dense<0.000000e+00> : vector<80x8xf32>
    %101 = tpu.matmul %98, %100, %cst_81 {dimension_numbers = #tpu.dot_dimension_numbers<[1], [0], [0], [1], [0, 0, 1, 1], [], []>} : vector<80x8xbf16>, vector<8x8xbf16>, vector<80x8xf32> -> vector<80x8xf32>
    %102 = arith.addf %97, %101 : vector<80x8xf32>
    %c20 = arith.constant 20 : index
    %c0_82 = arith.constant 0 : index
    %103 = vector.load %arg12[%c20, %c0_82] : memref<104x8xbf16, #tpu.memory_space<vmem>>, vector<80x8xbf16>
    %c6 = arith.constant 6 : index
    %c0_83 = arith.constant 0 : index
    %c0_84 = arith.constant 0 : index
    %104 = vector.load %arg5[%c6, %c0_83, %c0_84] : memref<9x8x8xbf16, #tpu.memory_space<vmem>>, vector<1x8x8xbf16>
    %105 = vector.shape_cast %104 : vector<1x8x8xbf16> to vector<8x8xbf16>
    %cst_85 = arith.constant dense<0.000000e+00> : vector<80x8xf32>
    %106 = tpu.matmul %103, %105, %cst_85 {dimension_numbers = #tpu.dot_dimension_numbers<[1], [0], [0], [1], [0, 0, 1, 1], [], []>} : vector<80x8xbf16>, vector<8x8xbf16>, vector<80x8xf32> -> vector<80x8xf32>
    %107 = arith.addf %102, %106 : vector<80x8xf32>
    %c21 = arith.constant 21 : index
    %c0_86 = arith.constant 0 : index
    %108 = vector.load %arg12[%c21, %c0_86] : memref<104x8xbf16, #tpu.memory_space<vmem>>, vector<80x8xbf16>
    %c7 = arith.constant 7 : index
    %c0_87 = arith.constant 0 : index
    %c0_88 = arith.constant 0 : index
    %109 = vector.load %arg5[%c7, %c0_87, %c0_88] : memref<9x8x8xbf16, #tpu.memory_space<vmem>>, vector<1x8x8xbf16>
    %110 = vector.shape_cast %109 : vector<1x8x8xbf16> to vector<8x8xbf16>
    %cst_89 = arith.constant dense<0.000000e+00> : vector<80x8xf32>
    %111 = tpu.matmul %108, %110, %cst_89 {dimension_numbers = #tpu.dot_dimension_numbers<[1], [0], [0], [1], [0, 0, 1, 1], [], []>} : vector<80x8xbf16>, vector<8x8xbf16>, vector<80x8xf32> -> vector<80x8xf32>
    %112 = arith.addf %107, %111 : vector<80x8xf32>
    %c22 = arith.constant 22 : index
    %c0_90 = arith.constant 0 : index
    %113 = vector.load %arg12[%c22, %c0_90] : memref<104x8xbf16, #tpu.memory_space<vmem>>, vector<80x8xbf16>
    %c8 = arith.constant 8 : index
    %c0_91 = arith.constant 0 : index
    %c0_92 = arith.constant 0 : index
    %114 = vector.load %arg5[%c8, %c0_91, %c0_92] : memref<9x8x8xbf16, #tpu.memory_space<vmem>>, vector<1x8x8xbf16>
    %115 = vector.shape_cast %114 : vector<1x8x8xbf16> to vector<8x8xbf16>
    %cst_93 = arith.constant dense<0.000000e+00> : vector<80x8xf32>
    %116 = tpu.matmul %113, %115, %cst_93 {dimension_numbers = #tpu.dot_dimension_numbers<[1], [0], [0], [1], [0, 0, 1, 1], [], []>} : vector<80x8xbf16>, vector<8x8xbf16>, vector<80x8xf32> -> vector<80x8xf32>
    %117 = arith.addf %112, %116 : vector<80x8xf32>
    %c0_94 = arith.constant 0 : index
    %c0_95 = arith.constant 0 : index
    %118 = vector.load %arg6[%c0_94, %c0_95] : memref<1x8xf32, #tpu.memory_space<vmem>>, vector<1x8xf32>
    %119 = vector.broadcast %118 : vector<1x8xf32> to vector<80x8xf32>
    %120 = arith.mulf %117, %119 : vector<80x8xf32>
    %c0_96 = arith.constant 0 : index
    %c0_97 = arith.constant 0 : index
    %121 = vector.load %arg7[%c0_96, %c0_97] : memref<1x8xf32, #tpu.memory_space<vmem>>, vector<1x8xf32>
    %122 = vector.broadcast %121 : vector<1x8xf32> to vector<80x8xf32>
    %123 = arith.addf %120, %122 : vector<80x8xf32>
    %124 = arith.addf %123, %65 : vector<80x8xf32>
    %cst_98 = arith.constant 0.000000e+00 : f32
    %125 = vector.broadcast %cst_98 : f32 to vector<80x8xf32>
    %126 = arith.maximumf %124, %125 : vector<80x8xf32>
    %c0_99 = arith.constant 0 : index
    %c0_100 = arith.constant 0 : index
    %c0_101 = arith.constant 0 : index
    %127 = vector.load %arg11[%c0_99, %c0_100, %c0_101] : memref<1x80x8xf32, #tpu.memory_space<vmem>>, vector<1x80x8xf32>
    %128 = vector.shape_cast %127 : vector<1x80x8xf32> to vector<80x8xf32>
    %129 = vector.shape_cast %126 : vector<80x8xf32> to vector<1x80x8xf32>
    tpu.vector_store %arg11[%c0_99, %c0_100, %c0_101], %129 {strides = array<i32>} : memref<1x80x8xf32, #tpu.memory_space<vmem>>, vector<1x80x8xf32>,
    return
  }
  func.func @transform_0(%arg0: i32) -> (i32, i32, i32) {
    %c0_i32 = arith.constant 0 : i32
    %c0_i32_0 = arith.constant 0 : i32
    %c0_i32_1 = arith.constant 0 : i32
    return %arg0, %c0_i32, %c0_i32_0 : i32, i32, i32
  }
  func.func @transform_1(%arg0: i32) -> (i32, i32, i32) {
    %c0_i32 = arith.constant 0 : i32
    %c0_i32_0 = arith.constant 0 : i32
    %c0_i32_1 = arith.constant 0 : i32
    %c0_i32_2 = arith.constant 0 : i32
    return %c0_i32, %c0_i32_0, %c0_i32_1 : i32, i32, i32
  }
  func.func @transform_2(%arg0: i32) -> (i32, i32) {
    %c0_i32 = arith.constant 0 : i32
    %c0_i32_0 = arith.constant 0 : i32
    %c0_i32_1 = arith.constant 0 : i32
    return %c0_i32, %c0_i32_0 : i32, i32
  }
  func.func @transform_3(%arg0: i32) -> (i32, i32) {
    %c0_i32 = arith.constant 0 : i32
    %c0_i32_0 = arith.constant 0 : i32
    %c0_i32_1 = arith.constant 0 : i32
    return %c0_i32, %c0_i32_0 : i32, i32
  }
  func.func @transform_4(%arg0: i32) -> (i32, i32, i32) {
    %c0_i32 = arith.constant 0 : i32
    %c0_i32_0 = arith.constant 0 : i32
    %c0_i32_1 = arith.constant 0 : i32
    %c0_i32_2 = arith.constant 0 : i32
    return %c0_i32, %c0_i32_0, %c0_i32_1 : i32, i32, i32
  }
  func.func @transform_5(%arg0: i32) -> (i32, i32) {
    %c0_i32 = arith.constant 0 : i32
    %c0_i32_0 = arith.constant 0 : i32
    %c0_i32_1 = arith.constant 0 : i32
    return %c0_i32, %c0_i32_0 : i32, i32
  }
  func.func @transform_6(%arg0: i32) -> (i32, i32) {
    %c0_i32 = arith.constant 0 : i32
    %c0_i32_0 = arith.constant 0 : i32
    %c0_i32_1 = arith.constant 0 : i32
    return %c0_i32, %c0_i32_0 : i32, i32
  }
  func.func @transform_7(%arg0: i32) -> (i32, i32) {
    %c0_i32 = arith.constant 0 : i32
    %c0_i32_0 = arith.constant 0 : i32
    %c0_i32_1 = arith.constant 0 : i32
    return %c0_i32, %c0_i32_0 : i32, i32
  }
  func.func @transform_8(%arg0: i32) -> (i32, i32) {
    %c0_i32 = arith.constant 0 : i32
    %c0_i32_0 = arith.constant 0 : i32
    %c0_i32_1 = arith.constant 0 : i32
    return %c0_i32, %c0_i32_0 : i32, i32
  }
  func.func @transform_9(%arg0: i32) -> (i32, i32) {
    %c0_i32 = arith.constant 0 : i32
    %c0_i32_0 = arith.constant 0 : i32
    %c0_i32_1 = arith.constant 0 : i32
    return %c0_i32, %c0_i32_0 : i32, i32
  }
  func.func @transform_10(%arg0: i32) -> (i32, i32, i32) {
    %c0_i32 = arith.constant 0 : i32
    %c0_i32_0 = arith.constant 0 : i32
    %c0_i32_1 = arith.constant 0 : i32
    return %arg0, %c0_i32, %c0_i32_0 : i32, i32, i32
  }
}

</mosaic_0001>

<llo_original>
// kernel: basic_block_forward.1
$region0: #{basic_block_forward.1}
  #allocation0 [shape = 'u32[]', space=smem, size = 0x4, offset = 0x4, fixed_abs, tag = 'smem constant byte address 0x4 - core index']
  #allocation1 [shape = 'u32[144,128]{1,0:T(1,128)}', space=vmem, size = 0x12000, scoped, tag = 'internal scratch']
  #allocation2 [shape = 'bf16[104,8]{1,0:T(8,128)(2,1)}', space=vmem, size = 0x6800, scoped, tag = 'scratch operand']
  %s0 = inlined_call_operand.vmem [shape: bf16[2,96,16], index: 0, kind: input, shape index: {}]
  %s1 = inlined_call_operand.vmem [shape: bf16[4,16,8], index: 1, kind: input, shape index: {}]
  %s2 = inlined_call_operand.vmem [shape: f32[1,8], index: 2, kind: input, shape index: {}]
  %s3 = inlined_call_operand.vmem [shape: f32[1,8], index: 3, kind: input, shape index: {}]
  %s4 = inlined_call_operand.vmem [shape: bf16[9,8,8], index: 4, kind: input, shape index: {}]
  %s5 = inlined_call_operand.vmem [shape: f32[1,8], index: 5, kind: input, shape index: {}]
  %s6 = inlined_call_operand.vmem [shape: f32[1,8], index: 6, kind: input, shape index: {}]
  %s7 = inlined_call_operand.vmem [shape: bf16[4,8], index: 7, kind: input, shape index: {}]
  %s8 = inlined_call_operand.vmem [shape: f32[1,8], index: 8, kind: input, shape index: {}]
  %s9 = inlined_call_operand.vmem [shape: f32[1,8], index: 9, kind: input, shape index: {}]
  %s10 = inlined_call_operand.vmem [shape: f32[2,80,8], index: 10, kind: output, shape index: {}]
  %s11 = sld [smem:[#allocation0]]
  $region73: #{basic_block_forward.1} parent=0
    _
  %s13 = ssub.s32 1, %s11
  %s14 = scalar_select 0, %s13, %s11
  loop: start=0, step=1, limit=4
  $region2: #{basic_block_forward.1} parent=0 // loop_pre_header
    _
  $region3: #{basic_block_forward.1} parent=0 // loop_header
    %s16 = sphi 0, %s20
    %p17 = scmp.ge.s32.totalorder %s16, 4
    %s26 = sphi 0, %s28
    %s29 = sphi 0, %s26
    %s30 = sphi 0, %s29
    %s46 = sphi 0, %s30
    %s50 = sphi 0, %s50
    %s52 = sphi 0, %s50
    %s53 = sphi 0, %s52
    %s67 = sphi 0, %s53
    %s71 = sphi 0, %s71
    %s73 = sphi 0, %s71
    %s74 = sphi 0, %s73
    %s88 = sphi 0, %s74
    %s92 = sphi 0, %s92
    %s94 = sphi 0, %s92
    %s95 = sphi 0, %s94
    %s109 = sphi 0, %s95
    %s113 = sphi 0, %s113
    %s115 = sphi 0, %s113
    %s116 = sphi 0, %s115
    %s130 = sphi 0, %s116
    %s134 = sphi 0, %s134
    %s136 = sphi 0, %s134
    %s137 = sphi 0, %s136
    %s151 = sphi 0, %s137
    %s155 = sphi 0, %s155
    %s157 = sphi 0, %s155
    %s158 = sphi 0, %s157
    %s172 = sphi 0, %s158
    %s176 = sphi 0, %s176
    %s178 = sphi 0, %s176
    %s179 = sphi 0, %s178
    %s193 = sphi 0, %s179
    %s197 = sphi 0, %s197
    %s199 = sphi 0, %s197
    %s200 = sphi 0, %s199
    %s214 = sphi 0, %s200
    %s218 = sphi 0, %s218
    %s220 = sphi 0, %s218
    %s221 = sphi 0, %s220
    %s235 = sphi 0, %s221
    %s241 = sphi 0, %s243
    %s244 = sphi 0, %s241
    %s245 = sphi 0, %s244
    %s261 = sphi 0, %s245
  $region4: #{basic_block_forward.1} parent=0 // loop_header_branch
    %19 = sbr.rel (%p17) target = $region8
  $region5: #{basic_block_forward.1} parent=0 // loop_body
    %s21 = ssub.s32 %s16, 1
    %s22 = ssub.s32 %s16, 2
    %s23 = sadd.s32 %s16, 1
    %s24 = ssub.s32 %s16, %s23
    %p25 = scmp.eq.s32.totalorder %s24, 0
    %s27 = sadd.s32 %s26, 1
    %s28 = scalar_select %p25, %s26, %s27
    %p31 = pneg %p25
    %p32 = scmp.eq.s32.totalorder %s16, 1
    %p33 = por %p31, %p32
    %p34 = scmp.ne.s32.totalorder %s26, %s29
    %p35 = scmp.eq.s32.totalorder %s16, 0
    %p36 = por %p34, %p35
    %p37 = scmp.ne.s32.totalorder %s26, %s29
    %p38 = scmp.eq.s32.totalorder %s21, 1
    %p39 = por %p37, %p38
    %p40 = scmp.ne.s32.totalorder %s29, %s30
    %p41 = scmp.eq.s32.totalorder %s21, 0
    %p42 = por %p40, %p41
    %p43 = scmp.ne.s32.totalorder %s29, %s30
    %p44 = scmp.eq.s32.totalorder %s22, 1
    %p45 = por %p43, %p44
    %p47 = scmp.ne.s32.totalorder %s30, %s46
    %p48 = scmp.eq.s32.totalorder %s22, 0
    %p49 = por %p47, %p48
    %s51 = sadd.s32 %s50, 1
    %p54 = scmp.eq.s32.totalorder %s16, 1
    %p55 = scmp.ne.s32.totalorder %s50, %s52
    %p56 = scmp.eq.s32.totalorder %s16, 0
    %p57 = por %p55, %p56
    %p58 = scmp.ne.s32.totalorder %s50, %s52
    %p59 = scmp.eq.s32.totalorder %s21, 1
    %p60 = por %p58, %p59
    %p61 = scmp.ne.s32.totalorder %s52, %s53
    %p62 = scmp.eq.s32.totalorder %s21, 0
    %p63 = por %p61, %p62
    %p64 = scmp.ne.s32.totalorder %s52, %s53
    %p65 = scmp.eq.s32.totalorder %s22, 1
    %p66 = por %p64, %p65
    %p68 = scmp.ne.s32.totalorder %s53, %s67
    %p69 = scmp.eq.s32.totalorder %s22, 0
    %p70 = por %p68, %p69
    %s72 = sadd.s32 %s71, 1
    %p75 = scmp.eq.s32.totalorder %s16, 1
    %p76 = scmp.ne.s32.totalorder %s71, %s73
    %p77 = scmp.eq.s32.totalorder %s16, 0
    %p78 = por %p76, %p77
    %p79 = scmp.ne.s32.totalorder %s71, %s73
    %p80 = scmp.eq.s32.totalorder %s21, 1
    %p81 = por %p79, %p80
    %p82 = scmp.ne.s32.totalorder %s73, %s74
    %p83 = scmp.eq.s32.totalorder %s21, 0
    %p84 = por %p82, %p83
    %p85 = scmp.ne.s32.totalorder %s73, %s74
    %p86 = scmp.eq.s32.totalorder %s22, 1
    %p87 = por %p85, %p86
    %p89 = scmp.ne.s32.totalorder %s74, %s88
    %p90 = scmp.eq.s32.totalorder %s22, 0
    %p91 = por %p89, %p90
    %s93 = sadd.s32 %s92, 1
    %p96 = scmp.eq.s32.totalorder %s16, 1
    %p97 = scmp.ne.s32.totalorder %s92, %s94
    %p98 = scmp.eq.s32.totalorder %s16, 0
    %p99 = por %p97, %p98
    %p100 = scmp.ne.s32.totalorder %s92, %s94
    %p101 = scmp.eq.s32.totalorder %s21, 1
    %p102 = por %p100, %p101
    %p103 = scmp.ne.s32.totalorder %s94, %s95
    %p104 = scmp.eq.s32.totalorder %s21, 0
    %p105 = por %p103, %p104
    %p106 = scmp.ne.s32.totalorder %s94, %s95
    %p107 = scmp.eq.s32.totalorder %s22, 1
    %p108 = por %p106, %p107
    %p110 = scmp.ne.s32.totalorder %s95, %s109
    %p111 = scmp.eq.s32.totalorder %s22, 0
    %p112 = por %p110, %p111
    %s114 = sadd.s32 %s113, 1
    %p117 = scmp.eq.s32.totalorder %s16, 1
    %p118 = scmp.ne.s32.totalorder %s113, %s115
    %p119 = scmp.eq.s32.totalorder %s16, 0
    %p120 = por %p118, %p119
    %p121 = scmp.ne.s32.totalorder %s113, %s115
    %p122 = scmp.eq.s32.totalorder %s21, 1
    %p123 = por %p121, %p122
    %p124 = scmp.ne.s32.totalorder %s115, %s116
    %p125 = scmp.eq.s32.totalorder %s21, 0
    %p126 = por %p124, %p125
    %p127 = scmp.ne.s32.totalorder %s115, %s116
    %p128 = scmp.eq.s32.totalorder %s22, 1
    %p129 = por %p127, %p128
    %p131 = scmp.ne.s32.totalorder %s116, %s130
    %p132 = scmp.eq.s32.totalorder %s22, 0
    %p133 = por %p131, %p132
    %s135 = sadd.s32 %s134, 1
    %p138 = scmp.eq.s32.totalorder %s16, 1
    %p139 = scmp.ne.s32.totalorder %s134, %s136
    %p140 = scmp.eq.s32.totalorder %s16, 0
    %p141 = por %p139, %p140
    %p142 = scmp.ne.s32.totalorder %s134, %s136
    %p143 = scmp.eq.s32.totalorder %s21, 1
    %p144 = por %p142, %p143
    %p145 = scmp.ne.s32.totalorder %s136, %s137
    %p146 = scmp.eq.s32.totalorder %s21, 0
    %p147 = por %p145, %p146
    %p148 = scmp.ne.s32.totalorder %s136, %s137
    %p149 = scmp.eq.s32.totalorder %s22, 1
    %p150 = por %p148, %p149
    %p152 = scmp.ne.s32.totalorder %s137, %s151
    %p153 = scmp.eq.s32.totalorder %s22, 0
    %p154 = por %p152, %p153
    %s156 = sadd.s32 %s155, 1
    %p159 = scmp.eq.s32.totalorder %s16, 1
    %p160 = scmp.ne.s32.totalorder %s155, %s157
    %p161 = scmp.eq.s32.totalorder %s16, 0
    %p162 = por %p160, %p161
    %p163 = scmp.ne.s32.totalorder %s155, %s157
    %p164 = scmp.eq.s32.totalorder %s21, 1
    %p165 = por %p163, %p164
    %p166 = scmp.ne.s32.totalorder %s157, %s158
    %p167 = scmp.eq.s32.totalorder %s21, 0
    %p168 = por %p166, %p167
    %p169 = scmp.ne.s32.totalorder %s157, %s158
    %p170 = scmp.eq.s32.totalorder %s22, 1
    %p171 = por %p169, %p170
    %p173 = scmp.ne.s32.totalorder %s158, %s172
    %p174 = scmp.eq.s32.totalorder %s22, 0
    %p175 = por %p173, %p174
    %s177 = sadd.s32 %s176, 1
    %p180 = scmp.eq.s32.totalorder %s16, 1
    %p181 = scmp.ne.s32.totalorder %s176, %s178
    %p182 = scmp.eq.s32.totalorder %s16, 0
    %p183 = por %p181, %p182
    %p184 = scmp.ne.s32.totalorder %s176, %s178
    %p185 = scmp.eq.s32.totalorder %s21, 1
    %p186 = por %p184, %p185
    %p187 = scmp.ne.s32.totalorder %s178, %s179
    %p188 = scmp.eq.s32.totalorder %s21, 0
    %p189 = por %p187, %p188
    %p190 = scmp.ne.s32.totalorder %s178, %s179
    %p191 = scmp.eq.s32.totalorder %s22, 1
    %p192 = por %p190, %p191
    %p194 = scmp.ne.s32.totalorder %s179, %s193
    %p195 = scmp.eq.s32.totalorder %s22, 0
    %p196 = por %p194, %p195
    %s198 = sadd.s32 %s197, 1
    %p201 = scmp.eq.s32.totalorder %s16, 1
    %p202 = scmp.ne.s32.totalorder %s197, %s199
    %p203 = scmp.eq.s32.totalorder %s16, 0
    %p204 = por %p202, %p203
    %p205 = scmp.ne.s32.totalorder %s197, %s199
    %p206 = scmp.eq.s32.totalorder %s21, 1
    %p207 = por %p205, %p206
    %p208 = scmp.ne.s32.totalorder %s199, %s200
    %p209 = scmp.eq.s32.totalorder %s21, 0
    %p210 = por %p208, %p209
    %p211 = scmp.ne.s32.totalorder %s199, %s200
    %p212 = scmp.eq.s32.totalorder %s22, 1
    %p213 = por %p211, %p212
    %p215 = scmp.ne.s32.totalorder %s200, %s214
    %p216 = scmp.eq.s32.totalorder %s22, 0
    %p217 = por %p215, %p216
    %s219 = sadd.s32 %s218, 1
    %p222 = scmp.eq.s32.totalorder %s16, 1
    %p223 = scmp.ne.s32.totalorder %s218, %s220
    %p224 = scmp.eq.s32.totalorder %s16, 0
    %p225 = por %p223, %p224
    %p226 = scmp.ne.s32.totalorder %s218, %s220
    %p227 = scmp.eq.s32.totalorder %s21, 1
    %p228 = por %p226, %p227
    %p229 = scmp.ne.s32.totalorder %s220, %s221
    %p230 = scmp.eq.s32.totalorder %s21, 0
    %p231 = por %p229, %p230
    %p232 = scmp.ne.s32.totalorder %s220, %s221
    %p233 = scmp.eq.s32.totalorder %s22, 1
    %p234 = por %p232, %p233
    %p236 = scmp.ne.s32.totalorder %s221, %s235
    %p237 = scmp.eq.s32.totalorder %s22, 0
    %p238 = por %p236, %p237
    %s239 = ssub.s32 %s16, %s23
    %p240 = scmp.eq.s32.totalorder %s239, 0
    %s242 = sadd.s32 %s241, 1
    %s243 = scalar_select %p240, %s241, %s242
    %p246 = pneg %p240
    %p247 = scmp.eq.s32.totalorder %s16, 1
    %p248 = por %p246, %p247
    %p249 = scmp.ne.s32.totalorder %s241, %s244
    %p250 = scmp.eq.s32.totalorder %s16, 0
    %p251 = por %p249, %p250
    %p252 = scmp.ne.s32.totalorder %s241, %s244
    %p253 = scmp.eq.s32.totalorder %s21, 1
    %p254 = por %p252, %p253
    %p255 = scmp.ne.s32.totalorder %s244, %s245
    %p256 = scmp.eq.s32.totalorder %s21, 0
    %p257 = por %p255, %p256
    %p258 = scmp.ne.s32.totalorder %s244, %s245
    %p259 = scmp.eq.s32.totalorder %s22, 1
    %p260 = por %p258, %p259
    %p262 = scmp.ne.s32.totalorder %s245, %s261
    %p263 = scmp.eq.s32.totalorder %s22, 0
    %p264 = por %p262, %p263
    %p265 = scmp.le.s32.totalorder 1, %s16
    %p266 = scmp.lt.s32.totalorder %s16, 3
    %p267 = pnand %p265, %p266
    %p268 = pneg %p267
    // Predicated region
    $region9: #{basic_block_forward.1} parent=5 // pred_check
      _
    $region10: #{basic_block_forward.1} parent=5 // pred_check_branch
      %270 = sbr.rel (%p267) target = $region12
    $region11: #{basic_block_forward.1} parent=5 // pred_region
      %s271 = ssub.s32 %s16, 1
      // Predicated region
      $region13: #{basic_block_forward.1} parent=11 // pred_check
        %p272 = pneg %p63
      $region14: #{basic_block_forward.1} parent=11 // pred_check_branch
        %274 = sbr.rel (%p272) target = $region16
      $region15: #{basic_block_forward.1} parent=11 // pred_region
        _
      $region16: #{basic_block_forward.1} parent=11 // pred_fallthru
        _
      // Predicated region
      $region17: #{basic_block_forward.1} parent=11 // pred_check
        %p275 = pneg %p84
      $region18: #{basic_block_forward.1} parent=11 // pred_check_branch
        %277 = sbr.rel (%p275) target = $region20
      $region19: #{basic_block_forward.1} parent=11 // pred_region
        _
      $region20: #{basic_block_forward.1} parent=11 // pred_fallthru
        _
      // Predicated region
      $region21: #{basic_block_forward.1} parent=11 // pred_check
        %p278 = pneg %p105
      $region22: #{basic_block_forward.1} parent=11 // pred_check_branch
        %280 = sbr.rel (%p278) target = $region24
      $region23: #{basic_block_forward.1} parent=11 // pred_region
        _
      $region24: #{basic_block_forward.1} parent=11 // pred_fallthru
        _
      // Predicated region
      $region25: #{basic_block_forward.1} parent=11 // pred_check
        %p281 = pneg %p126
      $region26: #{basic_block_forward.1} parent=11 // pred_check_branch
        %283 = sbr.rel (%p281) target = $region28
      $region27: #{basic_block_forward.1} parent=11 // pred_region
        _
      $region28: #{basic_block_forward.1} parent=11 // pred_fallthru
        _
      // Predicated region
      $region29: #{basic_block_forward.1} parent=11 // pred_check
        %p284 = pneg %p147
      $region30: #{basic_block_forward.1} parent=11 // pred_check_branch
        %286 = sbr.rel (%p284) target = $region32
      $region31: #{basic_block_forward.1} parent=11 // pred_region
        _
      $region32: #{basic_block_forward.1} parent=11 // pred_fallthru
        _
      // Predicated region
      $region33: #{basic_block_forward.1} parent=11 // pred_check
        %p287 = pneg %p168
      $region34: #{basic_block_forward.1} parent=11 // pred_check_branch
        %289 = sbr.rel (%p287) target = $region36
      $region35: #{basic_block_forward.1} parent=11 // pred_region
        _
      $region36: #{basic_block_forward.1} parent=11 // pred_fallthru
        _
      // Predicated region
      $region37: #{basic_block_forward.1} parent=11 // pred_check
        %p290 = pneg %p189
      $region38: #{basic_block_forward.1} parent=11 // pred_check_branch
        %292 = sbr.rel (%p290) target = $region40
      $region39: #{basic_block_forward.1} parent=11 // pred_region
        _
      $region40: #{basic_block_forward.1} parent=11 // pred_fallthru
        _
      // Predicated region
      $region41: #{basic_block_forward.1} parent=11 // pred_check
        %p293 = pneg %p210
      $region42: #{basic_block_forward.1} parent=11 // pred_check_branch
        %295 = sbr.rel (%p293) target = $region44
      $region43: #{basic_block_forward.1} parent=11 // pred_region
        _
      $region44: #{basic_block_forward.1} parent=11 // pred_fallthru
        _
      // Predicated region
      $region45: #{basic_block_forward.1} parent=11 // pred_check
        %p296 = pneg %p231
      $region46: #{basic_block_forward.1} parent=11 // pred_check_branch
        %298 = sbr.rel (%p296) target = $region48
      $region47: #{basic_block_forward.1} parent=11 // pred_region
        _
      $region48: #{basic_block_forward.1} parent=11 // pred_fallthru
        _
    $region12: #{basic_block_forward.1} parent=5 // pred_fallthru
      _
    %p299 = scmp.lt.s32.totalorder %s16, 2
    // Predicated region
    $region49: #{basic_block_forward.1} parent=5 // pred_check
      %p300 = pneg %p299
    $region50: #{basic_block_forward.1} parent=5 // pred_check_branch
      %302 = sbr.rel (%p300) target = $region52
    $region51: #{basic_block_forward.1} parent=5 // pred_region
      // Predicated region
      $region53: #{basic_block_forward.1} parent=51 // pred_check
        %p303 = pneg %p36
      $region54: #{basic_block_forward.1} parent=51 // pred_check_branch
        %305 = sbr.rel (%p303) target = $region56
      $region55: #{basic_block_forward.1} parent=51 // pred_region
        %p306 = scmp.lt.s32.totalorder %s16, 1
        %s307 = scalar_select %p306, %s16, 1
        %s308 = smul.addr %s307, 12
        %s309 = smul.addr %s308, 4
        %s310 = scalar_lea.vmem %s0, %s309
      $region56: #{basic_block_forward.1} parent=51 // pred_fallthru
        _
    $region52: #{basic_block_forward.1} parent=5 // pred_fallthru
      _
    %p311 = scmp.le.s32.totalorder 1, %s16
    %p312 = scmp.lt.s32.totalorder %s16, 3
    %p313 = pnand %p311, %p312
    %p314 = pneg %p313
    // Predicated region
    $region57: #{basic_block_forward.1} parent=5 // pred_check
      _
    $region58: #{basic_block_forward.1} parent=5 // pred_check_branch
      %316 = sbr.rel (%p313) target = $region60
    $region59: #{basic_block_forward.1} parent=5 // pred_region
      %s317 = ssub.s32 %s16, 1
      %p318 = scmp.lt.s32.totalorder %s21, 1
      %s319 = scalar_select %p318, %s21, 1
      %s320 = smul.addr %s319, 12
      %s321 = smul.addr %s320, 4
      %s322 = scalar_lea.vmem %s0, %s321
      %p323 = pneg %p42
      %p324 = pneg %p39
      %p325 = pneg %p63
      %p326 = pneg %p60
      %p327 = pneg %p84
      %p328 = pneg %p81
      %p329 = pneg %p105
      %p330 = pneg %p102
      %p331 = pneg %p126
      %p332 = pneg %p123
      %p333 = pneg %p147
      %p334 = pneg %p144
      %p335 = pneg %p168
      %p336 = pneg %p165
      %p337 = pneg %p189
      %p338 = pneg %p186
      %p339 = pneg %p210
      %p340 = pneg %p207
      %p341 = pneg %p231
      %p342 = pneg %p228
      %p343 = pneg %p257
      %p344 = pneg %p254
      %p345 = scmp.lt.s32.totalorder %s21, 1
      %s346 = scalar_select %p345, %s21, 1
      %s347 = smul.addr %s346, 10
      %s348 = smul.addr %s347, 8
      %s349 = scalar_lea.vmem %s10, %s348
      %p350 = scmp.lt.s32.totalorder %s21, 1
      %s351 = scalar_select %p350, %s21, 1
      %s352 = smul.addr %s351, 12
      %s353 = smul.addr %s352, 4
      %s354 = scalar_lea.vmem %s0, %s353
      %p355 = scmp.lt.s32.totalorder %s21, 1
      %s356 = scalar_select %p355, %s21, 1
      %s357 = smul.addr %s356, 10
      %s358 = smul.addr %s357, 8
      %s359 = scalar_lea.vmem %s10, %s358
      %v361 = vlaneseq
      %v362 = vshrl.u32 %v361, 7
      %v363 = vadd.s32 %v362, 8
      %v364 = vadd.s32 %v362, 16
      %v365 = vadd.s32 %v362, 24
      %v366 = vadd.s32 %v362, 32
      %v367 = vadd.s32 %v362, 40
      %v368 = vadd.s32 %v362, 48
      %v369 = vadd.s32 %v362, 56
      %v370 = vadd.s32 %v362, 64
      %v371 = vadd.s32 %v362, 72
      %vm372 = vcmp.lt.s32.totalorder %v362, 0
      %v373 = vsub.s32 0, %v362
      %v374 = vsel %vm372, %v373, %v362
      %v375 = vmul.u32.u64.compose %v374, 3435973837
      %v376 = vextract.low.u32 %v375
      %v377 = vextract.high.u32 %v375
      %v378 = vshrl.u32 %v377, 3
      %v379 = vmul.u32 %v378, 10
      %v380 = vsub.s32 %v374, %v379
      %v381 = vsub.s32 0, %v380
      %v382 = vsel %vm372, %v381, %v380
      %vm383 = vcmp.lt.s32.totalorder %v363, 0
      %v384 = vsub.s32 0, %v363
      %v385 = vsel %vm383, %v384, %v363
      %v386 = vmul.u32.u64.compose %v385, 3435973837
      %v387 = vextract.low.u32 %v386
      %v388 = vextract.high.u32 %v386
      %v389 = vshrl.u32 %v388, 3
      %v390 = vmul.u32 %v389, 10
      %v391 = vsub.s32 %v385, %v390
      %v392 = vsub.s32 0, %v391
      %v393 = vsel %vm383, %v392, %v391
      %vm394 = vcmp.lt.s32.totalorder %v364, 0
      %v395 = vsub.s32 0, %v364
      %v396 = vsel %vm394, %v395, %v364
      %v397 = vmul.u32.u64.compose %v396, 3435973837
      %v398 = vextract.low.u32 %v397
      %v399 = vextract.high.u32 %v397
      %v400 = vshrl.u32 %v399, 3
      %v401 = vmul.u32 %v400, 10
      %v402 = vsub.s32 %v396, %v401
      %v403 = vsub.s32 0, %v402
      %v404 = vsel %vm394, %v403, %v402
      %vm405 = vcmp.lt.s32.totalorder %v365, 0
      %v406 = vsub.s32 0, %v365
      %v407 = vsel %vm405, %v406, %v365
      %v408 = vmul.u32.u64.compose %v407, 3435973837
      %v409 = vextract.low.u32 %v408
      %v410 = vextract.high.u32 %v408
      %v411 = vshrl.u32 %v410, 3
      %v412 = vmul.u32 %v411, 10
      %v413 = vsub.s32 %v407, %v412
      %v414 = vsub.s32 0, %v413
      %v415 = vsel %vm405, %v414, %v413
      %vm416 = vcmp.lt.s32.totalorder %v366, 0
      %v417 = vsub.s32 0, %v366
      %v418 = vsel %vm416, %v417, %v366
      %v419 = vmul.u32.u64.compose %v418, 3435973837
      %v420 = vextract.low.u32 %v419
      %v421 = vextract.high.u32 %v419
      %v422 = vshrl.u32 %v421, 3
      %v423 = vmul.u32 %v422, 10
      %v424 = vsub.s32 %v418, %v423
      %v425 = vsub.s32 0, %v424
      %v426 = vsel %vm416, %v425, %v424
      %vm427 = vcmp.lt.s32.totalorder %v367, 0
      %v428 = vsub.s32 0, %v367
      %v429 = vsel %vm427, %v428, %v367
      %v430 = vmul.u32.u64.compose %v429, 3435973837
      %v431 = vextract.low.u32 %v430
      %v432 = vextract.high.u32 %v430
      %v433 = vshrl.u32 %v432, 3
      %v434 = vmul.u32 %v433, 10
      %v435 = vsub.s32 %v429, %v434
      %v436 = vsub.s32 0, %v435
      %v437 = vsel %vm427, %v436, %v435
      %vm438 = vcmp.lt.s32.totalorder %v368, 0
      %v439 = vsub.s32 0, %v368
      %v440 = vsel %vm438, %v439, %v368
      %v441 = vmul.u32.u64.compose %v440, 3435973837
      %v442 = vextract.low.u32 %v441
      %v443 = vextract.high.u32 %v441
      %v444 = vshrl.u32 %v443, 3
      %v445 = vmul.u32 %v444, 10
      %v446 = vsub.s32 %v440, %v445
      %v447 = vsub.s32 0, %v446
      %v448 = vsel %vm438, %v447, %v446
      %vm449 = vcmp.lt.s32.totalorder %v369, 0
      %v450 = vsub.s32 0, %v369
      %v451 = vsel %vm449, %v450, %v369
      %v452 = vmul.u32.u64.compose %v451, 3435973837
      %v453 = vextract.low.u32 %v452
      %v454 = vextract.high.u32 %v452
      %v455 = vshrl.u32 %v454, 3
      %v456 = vmul.u32 %v455, 10
      %v457 = vsub.s32 %v451, %v456
      %v458 = vsub.s32 0, %v457
      %v459 = vsel %vm449, %v458, %v457
      %vm460 = vcmp.lt.s32.totalorder %v370, 0
      %v461 = vsub.s32 0, %v370
      %v462 = vsel %vm460, %v461, %v370
      %v463 = vmul.u32.u64.compose %v462, 3435973837
      %v464 = vextract.low.u32 %v463
      %v465 = vextract.high.u32 %v463
      %v466 = vshrl.u32 %v465, 3
      %v467 = vmul.u32 %v466, 10
      %v468 = vsub.s32 %v462, %v467
      %v469 = vsub.s32 0, %v468
      %v470 = vsel %vm460, %v469, %v468
      %vm471 = vcmp.lt.s32.totalorder %v371, 0
      %v472 = vsub.s32 0, %v371
      %v473 = vsel %vm471, %v472, %v371
      %v474 = vmul.u32.u64.compose %v473, 3435973837
      %v475 = vextract.low.u32 %v474
      %v476 = vextract.high.u32 %v474
      %v477 = vshrl.u32 %v476, 3
      %v478 = vmul.u32 %v477, 10
      %v479 = vsub.s32 %v473, %v478
      %v480 = vsub.s32 0, %v479
      %v481 = vsel %vm471, %v480, %v479
      %vm482 = vcmp.ne.s32.totalorder %v382, 0
      %vm483 = vcmp.ne.s32.totalorder %v393, 0
      %vm484 = vcmp.ne.s32.totalorder %v404, 0
      %vm485 = vcmp.ne.s32.totalorder %v415, 0
      %vm486 = vcmp.ne.s32.totalorder %v426, 0
      %vm487 = vcmp.ne.s32.totalorder %v437, 0
      %vm488 = vcmp.ne.s32.totalorder %v448, 0
      %vm489 = vcmp.ne.s32.totalorder %v459, 0
      %vm490 = vcmp.ne.s32.totalorder %v470, 0
      %vm491 = vcmp.ne.s32.totalorder %v481, 0
      %vm492 = vcmp.lt.s32.totalorder %v382, 0
      %vm493 = vcmp.lt.s32.totalorder %v393, 0
      %vm494 = vcmp.lt.s32.totalorder %v404, 0
      %vm495 = vcmp.lt.s32.totalorder %v415, 0
      %vm496 = vcmp.lt.s32.totalorder %v426, 0
      %vm497 = vcmp.lt.s32.totalorder %v437, 0
      %vm498 = vcmp.lt.s32.totalorder %v448, 0
      %vm499 = vcmp.lt.s32.totalorder %v459, 0
      %vm500 = vcmp.lt.s32.totalorder %v470, 0
      %vm501 = vcmp.lt.s32.totalorder %v481, 0
      %vm502 = vmand %vm492, %vm482
      %vm503 = vmand %vm493, %vm483
      %vm504 = vmand %vm494, %vm484
      %vm505 = vmand %vm495, %vm485
      %vm506 = vmand %vm496, %vm486
      %vm507 = vmand %vm497, %vm487
      %vm508 = vmand %vm498, %vm488
      %vm509 = vmand %vm499, %vm489
      %vm510 = vmand %vm500, %vm490
      %vm511 = vmand %vm501, %vm491
      %v512 = vadd.s32 %v382, 10
      %v513 = vadd.s32 %v393, 10
      %v514 = vadd.s32 %v404, 10
      %v515 = vadd.s32 %v415, 10
      %v516 = vadd.s32 %v426, 10
      %v517 = vadd.s32 %v437, 10
      %v518 = vadd.s32 %v448, 10
      %v519 = vadd.s32 %v459, 10
      %v520 = vadd.s32 %v470, 10
      %v521 = vadd.s32 %v481, 10
      %v522 = vsel %vm502, %v512, %v382
      %v523 = vsel %vm503, %v513, %v393
      %v524 = vsel %vm504, %v514, %v404
      %v525 = vsel %vm505, %v515, %v415
      %v526 = vsel %vm506, %v516, %v426
      %v527 = vsel %vm507, %v517, %v437
      %v528 = vsel %vm508, %v518, %v448
      %v529 = vsel %vm509, %v519, %v459
      %v530 = vsel %vm510, %v520, %v470
      %v531 = vsel %vm511, %v521, %v481
      %vm532 = vcmp.lt.s32.totalorder %v522, 8
      %vm533 = vcmp.lt.s32.totalorder %v523, 8
      %vm534 = vcmp.lt.s32.totalorder %v524, 8
      %vm535 = vcmp.lt.s32.totalorder %v525, 8
      %vm536 = vcmp.lt.s32.totalorder %v526, 8
      %vm537 = vcmp.lt.s32.totalorder %v527, 8
      %vm538 = vcmp.lt.s32.totalorder %v528, 8
      %vm539 = vcmp.lt.s32.totalorder %v529, 8
      %vm540 = vcmp.lt.s32.totalorder %v530, 8
      %vm541 = vcmp.lt.s32.totalorder %v531, 8
      %v542 = vld [vmem:[%s354] sm:$0xf]
      %v543 = vld [vmem:[%s354 + $0x4] sm:$0xf]
      %v544 = vld [vmem:[%s354 + $0x8] sm:$0xf]
      %v545 = vld [vmem:[%s354 + $0xc] sm:$0xf]
      %v546 = vld [vmem:[%s354 + $0x10] sm:$0xf]
      %v547 = vld [vmem:[%s354 + $0x14] sm:$0xf]
      %v548 = vld [vmem:[%s354 + $0x18] sm:$0xf]
      %v549 = vld [vmem:[%s354 + $0x1c] sm:$0xf]
      %v550 = vld [vmem:[%s354 + $0x20] sm:$0xf]
      %v551 = vld [vmem:[%s354 + $0x24] sm:$0xf]
      %v552 = vld [vmem:[%s1] sm:$0xf]
      %v553 = vld [vmem:[%s1 + $0x4] sm:$0xf]
      %v554 = vld [vmem:[%s354 + $0x28] sm:$0x1]
      %s555 = scalar_lea.vmem %s1, 8
      %v556 = vld [vmem:[%s555] sm:$0xf]
      %v557 = vld [vmem:[%s555 + $0x4] sm:$0xf]
      %v569 = vunpack.c.l.b16 %v542
      %v570 = vunpack.c.l.b16 %v543
      %v571 = vunpack.c.l.b16 %v544
      %v572 = vunpack.c.l.b16 %v545
      %v573 = vunpack.c.l.b16 %v546
      %v574 = vunpack.c.l.b16 %v547
      %v575 = vunpack.c.l.b16 %v548
      %v576 = vunpack.c.l.b16 %v549
      %v577 = vunpack.c.l.b16 %v550
      %v578 = vunpack.c.l.b16 %v551
      %v579 = vunpack.c.l.b16 %v554
      %v580 = vpack.c.b16 %v570, %v569
      %v581 = vpack.c.b16 %v572, %v571
      %v582 = vpack.c.b16 %v574, %v573
      %v583 = vpack.c.b16 %v576, %v575
      %v584 = vpack.c.b16 %v578, %v577
      %v585 = vpack.c.b16 %v579, %v579
      %vm586 = vsmask.f32 7424
      %v588 = vshrl.u32 %v580, 16
      %v590 = vshll.u32 %v580, 16
      %v592 = vrot.slane %v590, 1
      %v593 = vor.u32 %v588, %v592
      %v595 = vshll.u32 %v581, 16
      %v597 = vrot.slane %v595, 1
      %v598 = vsel %vm586, %v593, %v597
      %v599 = vshrl.u32 %v581, 16
      %v601 = vor.u32 %v599, %v597
      %v603 = vshll.u32 %v582, 16
      %v605 = vrot.slane %v603, 1
      %v606 = vsel %vm586, %v601, %v605
      %v607 = vshrl.u32 %v582, 16
      %v609 = vor.u32 %v607, %v605
      %v611 = vshll.u32 %v583, 16
      %v613 = vrot.slane %v611, 1
      %v614 = vsel %vm586, %v609, %v613
      %v615 = vshrl.u32 %v583, 16
      %v617 = vor.u32 %v615, %v613
      %v619 = vshll.u32 %v584, 16
      %v621 = vrot.slane %v619, 1
      %v622 = vsel %vm586, %v617, %v621
      %v623 = vshrl.u32 %v584, 16
      %v625 = vor.u32 %v623, %v621
      %v627 = vshll.u32 %v585, 16
      %v629 = vrot.slane %v627, 1
      %v630 = vsel %vm586, %v625, %v629
      %v633 = vunpack.c.l.b16 %v556
      %v634 = vunpack.c.l.b16 %v557
      %v635 = vpack.c.b16 %v634, %v633
      %vm637 = vcmask 130048
      %v639 = vsel %vm637, %v598, 0
      %v642 = vsel %vm637, %v606, 0
      %v645 = vsel %vm637, %v614, 0
      %v648 = vsel %vm637, %v622, 0
      %v651 = vsel %vm637, %v630, 0
      %653 = vmatprep.subr.bf16.mxu0 0
      %654 = vmatpush1.bf16.msra.mxu0 0
      %655 = vmatprep.subr.bf16.mxu0 0
      %656 = vmatpush1.bf16.msra.mxu0 0
      %657 = vmatprep.subr.bf16.mxu0 0
      %658 = vmatpush1.bf16.msra.mxu0 0
      %659 = vmatprep.subr.bf16.mxu0 0
      %660 = vmatpush1.bf16.msra.mxu0 0
      %661 = vmatprep.subr.bf16.mxu0 0
      %662 = vmatpush1.bf16.msra.mxu0 0
      %663 = vmatprep.subr.bf16.mxu0 0
      %664 = vmatpush1.bf16.msra.mxu0 0
      %665 = vmatprep.subr.bf16.mxu0 0
      %666 = vmatpush1.bf16.msra.mxu0 0
      %667 = vmatprep.subr.bf16.mxu0 0
      %668 = vmatpush1.bf16.msra.mxu0 %v635
      %669 = vmatprep.subr.bf16.mxu0 0
      %670 = vmatpush2.bf16.msra.mxu0 0
      %671 = vmatprep.subr.bf16.mxu0 0
      %672 = vmatpush2.bf16.msra.mxu0 0
      %673 = vmatprep.subr.bf16.mxu0 0
      %674 = vmatpush2.bf16.msra.mxu0 0
      %675 = vmatprep.subr.bf16.mxu0 0
      %676 = vmatpush2.bf16.msra.mxu0 0
      %677 = vmatprep.subr.bf16.mxu0 0
      %678 = vmatpush2.bf16.msra.mxu0 0
      %679 = vmatprep.subr.bf16.mxu0 0
      %680 = vmatpush2.bf16.msra.mxu0 0
      %681 = vmatprep.subr.bf16.mxu0 0
      %682 = vmatpush2.bf16.msra.mxu0 0
      %683 = vmatprep.subr.bf16.mxu0 0
      %684 = vmatpush2.bf16.msra.mxu0 0
      %685 = vmatprep.mubr.bf16.mxu0 0
      %686 = vmatmul.mubr.bf16.gmra.mxu0 %v639
      %v687 = vpop.f32.mrf.mxu0
      %v688 = vadd.f32 0.0, %v687
      %v689 = vpop.f32.mrf.mxu0
      %v690 = vpop.f32.mrf.mxu0
      %v691 = vadd.f32 0.0, %v690
      %v692 = vpop.f32.mrf.mxu0
      %693 = vmatprep.mubr.bf16.mxu0 0
      %694 = vmatmul.mubr.bf16.gmra.mxu0 %v642
      %v695 = vpop.f32.mrf.mxu0
      %v696 = vadd.f32 0.0, %v695
      %v697 = vpop.f32.mrf.mxu0
      %v698 = vpop.f32.mrf.mxu0
      %v699 = vadd.f32 0.0, %v698
      %v700 = vpop.f32.mrf.mxu0
      %701 = vmatprep.mubr.bf16.mxu0 0
      %702 = vmatmul.mubr.bf16.gmra.mxu0 %v645
      %v703 = vpop.f32.mrf.mxu0
      %v704 = vadd.f32 0.0, %v703
      %v705 = vpop.f32.mrf.mxu0
      %v706 = vpop.f32.mrf.mxu0
      %v707 = vadd.f32 0.0, %v706
      %v708 = vpop.f32.mrf.mxu0
      %709 = vmatprep.mubr.bf16.mxu0 0
      %710 = vmatmul.mubr.bf16.gmra.mxu0 %v648
      %v711 = vpop.f32.mrf.mxu0
      %v712 = vadd.f32 0.0, %v711
      %v713 = vpop.f32.mrf.mxu0
      %v714 = vpop.f32.mrf.mxu0
      %v715 = vadd.f32 0.0, %v714
      %v716 = vpop.f32.mrf.mxu0
      %717 = vmatprep.mubr.bf16.mxu0 0
      %718 = vmatmul.mubr.bf16.gmra.mxu0 %v651
      %v719 = vpop.f32.mrf.mxu0
      %v720 = vadd.f32 0.0, %v719
      %v721 = vpop.f32.mrf.mxu0
      %v722 = vpop.f32.mrf.mxu0
      %v723 = vadd.f32 0.0, %v722
      %v724 = vpop.f32.mrf.mxu0
      %725 = vdwg.mxu0
      %v728 = vunpack.c.l.b16 %v552
      %v729 = vunpack.c.l.b16 %v553
      %v730 = vpack.c.b16 %v729, %v728
      %v732 = vsel %vm637, %v580, 0
      %v734 = vsel %vm637, %v581, 0
      %v736 = vsel %vm637, %v582, 0
      %v738 = vsel %vm637, %v583, 0
      %v740 = vsel %vm637, %v584, 0
      %742 = vmatprep.subr.bf16.mxu0 0
      %743 = vmatpush1.bf16.msra.mxu0 0
      %744 = vmatprep.subr.bf16.mxu0 0
      %745 = vmatpush1.bf16.msra.mxu0 0
      %746 = vmatprep.subr.bf16.mxu0 0
      %747 = vmatpush1.bf16.msra.mxu0 0
      %748 = vmatprep.subr.bf16.mxu0 0
      %749 = vmatpush1.bf16.msra.mxu0 0
      %750 = vmatprep.subr.bf16.mxu0 0
      %751 = vmatpush1.bf16.msra.mxu0 0
      %752 = vmatprep.subr.bf16.mxu0 0
      %753 = vmatpush1.bf16.msra.mxu0 0
      %754 = vmatprep.subr.bf16.mxu0 0
      %755 = vmatpush1.bf16.msra.mxu0 0
      %756 = vmatprep.subr.bf16.mxu0 0
      %757 = vmatpush1.bf16.msra.mxu0 %v730
      %758 = vmatprep.subr.bf16.mxu0 0
      %759 = vmatpush2.bf16.msra.mxu0 0
      %760 = vmatprep.subr.bf16.mxu0 0
      %761 = vmatpush2.bf16.msra.mxu0 0
      %762 = vmatprep.subr.bf16.mxu0 0
      %763 = vmatpush2.bf16.msra.mxu0 0
      %764 = vmatprep.subr.bf16.mxu0 0
      %765 = vmatpush2.bf16.msra.mxu0 0
      %766 = vmatprep.subr.bf16.mxu0 0
      %767 = vmatpush2.bf16.msra.mxu0 0
      %768 = vmatprep.subr.bf16.mxu0 0
      %769 = vmatpush2.bf16.msra.mxu0 0
      %770 = vmatprep.subr.bf16.mxu0 0
      %771 = vmatpush2.bf16.msra.mxu0 0
      %772 = vmatprep.subr.bf16.mxu0 0
      %773 = vmatpush2.bf16.msra.mxu0 0
      %774 = vmatprep.mubr.bf16.mxu0 0
      %775 = vmatmul.mubr.bf16.gmra.mxu0 %v732
      %v776 = vpop.f32.mrf.mxu0
      %v777 = vadd.f32 %v688, %v776
      %v778 = vpop.f32.mrf.mxu0
      %v779 = vpop.f32.mrf.mxu0
      %v780 = vadd.f32 %v691, %v779
      %v781 = vpop.f32.mrf.mxu0
      %782 = vmatprep.mubr.bf16.mxu0 0
      %783 = vmatmul.mubr.bf16.gmra.mxu0 %v734
      %v784 = vpop.f32.mrf.mxu0
      %v785 = vadd.f32 %v696, %v784
      %v786 = vpop.f32.mrf.mxu0
      %v787 = vpop.f32.mrf.mxu0
      %v788 = vadd.f32 %v699, %v787
      %v789 = vpop.f32.mrf.mxu0
      %790 = vmatprep.mubr.bf16.mxu0 0
      %791 = vmatmul.mubr.bf16.gmra.mxu0 %v736
      %v792 = vpop.f32.mrf.mxu0
      %v793 = vadd.f32 %v704, %v792
      %v794 = vpop.f32.mrf.mxu0
      %v795 = vpop.f32.mrf.mxu0
      %v796 = vadd.f32 %v707, %v795
      %v797 = vpop.f32.mrf.mxu0
      %798 = vmatprep.mubr.bf16.mxu0 0
      %799 = vmatmul.mubr.bf16.gmra.mxu0 %v738
      %v800 = vpop.f32.mrf.mxu0
      %v801 = vadd.f32 %v712, %v800
      %v802 = vpop.f32.mrf.mxu0
      %v803 = vpop.f32.mrf.mxu0
      %v804 = vadd.f32 %v715, %v803
      %v805 = vpop.f32.mrf.mxu0
      %806 = vmatprep.mubr.bf16.mxu0 0
      %807 = vmatmul.mubr.bf16.gmra.mxu0 %v740
      %v808 = vpop.f32.mrf.mxu0
      %v809 = vadd.f32 %v720, %v808
      %v810 = vpop.f32.mrf.mxu0
      %v811 = vpop.f32.mrf.mxu0
      %v812 = vadd.f32 %v723, %v811
      %v813 = vpop.f32.mrf.mxu0
      %814 = vdwg.mxu0
      %v815 = vld [vmem:[%s354 + $0x4] sm:$0xe]
      %v816 = vld [vmem:[%s354 + $0x8] sm:$0xf]
      %v817 = vld [vmem:[%s354 + $0xc] sm:$0xf]
      %v818 = vld [vmem:[%s354 + $0x10] sm:$0xf]
      %v819 = vld [vmem:[%s354 + $0x14] sm:$0xf]
      %v820 = vld [vmem:[%s354 + $0x18] sm:$0xf]
      %v821 = vld [vmem:[%s354 + $0x1c] sm:$0xf]
      %v822 = vld [vmem:[%s354 + $0x20] sm:$0xf]
      %v823 = vld [vmem:[%s354 + $0x24] sm:$0xf]
      %v824 = vld [vmem:[%s354 + $0x28] sm:$0xf]
      %v825 = vld [vmem:[%s354 + $0x2c] sm:$0x1]
      %s826 = scalar_lea.vmem %s1, 16
      %v827 = vld [vmem:[%s826] sm:$0xf]
      %v828 = vld [vmem:[%s826 + $0x4] sm:$0xf]
      %v840 = vunpack.c.l.b16 %v815
      %v841 = vunpack.c.l.b16 %v816
      %v842 = vunpack.c.l.b16 %v817
      %v843 = vunpack.c.l.b16 %v818
      %v844 = vunpack.c.l.b16 %v819
      %v845 = vunpack.c.l.b16 %v820
      %v846 = vunpack.c.l.b16 %v821
      %v847 = vunpack.c.l.b16 %v822
      %v848 = vunpack.c.l.b16 %v823
      %v849 = vunpack.c.l.b16 %v824
      %v850 = vunpack.c.l.b16 %v825
      %v851 = vpack.c.b16 %v841, %v840
      %v852 = vpack.c.b16 %v843, %v842
      %v853 = vpack.c.b16 %v845, %v844
      %v854 = vpack.c.b16 %v847, %v846
      %v855 = vpack.c.b16 %v849, %v848
      %v856 = vpack.c.b16 %v850, %v850
      %vm857 = vcmask 1046528
      %v858 = vrot.slane %v851, 1
      %v859 = vrot.slane %v852, 1
      %v860 = vsel %vm857, %v858, %v859
      %v861 = vrot.slane %v853, 1
      %v862 = vsel %vm857, %v859, %v861
      %v863 = vrot.slane %v854, 1
      %v864 = vsel %vm857, %v861, %v863
      %v865 = vrot.slane %v855, 1
      %v866 = vsel %vm857, %v863, %v865
      %v867 = vrot.slane %v856, 1
      %v868 = vsel %vm857, %v865, %v867
      %v871 = vunpack.c.l.b16 %v827
      %v872 = vunpack.c.l.b16 %v828
      %v873 = vpack.c.b16 %v872, %v871
      %v876 = vsel %vm637, %v860, 0
      %v879 = vsel %vm637, %v862, 0
      %v882 = vsel %vm637, %v864, 0
      %v885 = vsel %vm637, %v866, 0
      %v888 = vsel %vm637, %v868, 0
      %890 = vmatprep.subr.bf16.mxu0 0
      %891 = vmatpush1.bf16.msra.mxu0 0
      %892 = vmatprep.subr.bf16.mxu0 0
      %893 = vmatpush1.bf16.msra.mxu0 0
      %894 = vmatprep.subr.bf16.mxu0 0
      %895 = vmatpush1.bf16.msra.mxu0 0
      %896 = vmatprep.subr.bf16.mxu0 0
      %897 = vmatpush1.bf16.msra.mxu0 0
      %898 = vmatprep.subr.bf16.mxu0 0
      %899 = vmatpush1.bf16.msra.mxu0 0
      %900 = vmatprep.subr.bf16.mxu0 0
      %901 = vmatpush1.bf16.msra.mxu0 0
      %902 = vmatprep.subr.bf16.mxu0 0
      %903 = vmatpush1.bf16.msra.mxu0 0
      %904 = vmatprep.subr.bf16.mxu0 0
      %905 = vmatpush1.bf16.msra.mxu0 %v873
      %906 = vmatprep.subr.bf16.mxu0 0
      %907 = vmatpush2.bf16.msra.mxu0 0
      %908 = vmatprep.subr.bf16.mxu0 0
      %909 = vmatpush2.bf16.msra.mxu0 0
      %910 = vmatprep.subr.bf16.mxu0 0
      %911 = vmatpush2.bf16.msra.mxu0 0
      %912 = vmatprep.subr.bf16.mxu0 0
      %913 = vmatpush2.bf16.msra.mxu0 0
      %914 = vmatprep.subr.bf16.mxu0 0
      %915 = vmatpush2.bf16.msra.mxu0 0
      %916 = vmatprep.subr.bf16.mxu0 0
      %917 = vmatpush2.bf16.msra.mxu0 0
      %918 = vmatprep.subr.bf16.mxu0 0
      %919 = vmatpush2.bf16.msra.mxu0 0
      %920 = vmatprep.subr.bf16.mxu0 0
      %921 = vmatpush2.bf16.msra.mxu0 0
      %922 = vmatprep.mubr.bf16.mxu0 0
      %923 = vmatmul.mubr.bf16.gmra.mxu0 %v876
      %v924 = vpop.f32.mrf.mxu0
      %v925 = vadd.f32 0.0, %v924
      %v926 = vpop.f32.mrf.mxu0
      %v927 = vpop.f32.mrf.mxu0
      %v928 = vadd.f32 0.0, %v927
      %v929 = vpop.f32.mrf.mxu0
      %930 = vmatprep.mubr.bf16.mxu0 0
      %931 = vmatmul.mubr.bf16.gmra.mxu0 %v879
      %v932 = vpop.f32.mrf.mxu0
      %v933 = vadd.f32 0.0, %v932
      %v934 = vpop.f32.mrf.mxu0
      %v935 = vpop.f32.mrf.mxu0
      %v936 = vadd.f32 0.0, %v935
      %v937 = vpop.f32.mrf.mxu0
      %938 = vmatprep.mubr.bf16.mxu0 0
      %939 = vmatmul.mubr.bf16.gmra.mxu0 %v882
      %v940 = vpop.f32.mrf.mxu0
      %v941 = vadd.f32 0.0, %v940
      %v942 = vpop.f32.mrf.mxu0
      %v943 = vpop.f32.mrf.mxu0
      %v944 = vadd.f32 0.0, %v943
      %v945 = vpop.f32.mrf.mxu0
      %946 = vmatprep.mubr.bf16.mxu0 0
      %947 = vmatmul.mubr.bf16.gmra.mxu0 %v885
      %v948 = vpop.f32.mrf.mxu0
      %v949 = vadd.f32 0.0, %v948
      %v950 = vpop.f32.mrf.mxu0
      %v951 = vpop.f32.mrf.mxu0
      %v952 = vadd.f32 0.0, %v951
      %v953 = vpop.f32.mrf.mxu0
      %954 = vmatprep.mubr.bf16.mxu0 0
      %955 = vmatmul.mubr.bf16.gmra.mxu0 %v888
      %v956 = vpop.f32.mrf.mxu0
      %v957 = vadd.f32 0.0, %v956
      %v958 = vpop.f32.mrf.mxu0
      %v959 = vpop.f32.mrf.mxu0
      %v960 = vadd.f32 0.0, %v959
      %v961 = vpop.f32.mrf.mxu0
      %962 = vdwg.mxu0
      %v963 = vadd.f32 %v777, %v925
      %v964 = vadd.f32 %v780, %v928
      %v965 = vadd.f32 %v785, %v933
      %v966 = vadd.f32 %v788, %v936
      %v967 = vadd.f32 %v793, %v941
      %v968 = vadd.f32 %v796, %v944
      %v969 = vadd.f32 %v801, %v949
      %v970 = vadd.f32 %v804, %v952
      %v971 = vadd.f32 %v809, %v957
      %v972 = vadd.f32 %v812, %v960
      %v973 = vld [vmem:[%s354 + $0x2c] sm:$0x3]
      %s974 = scalar_lea.vmem %s1, 24
      %v975 = vld [vmem:[%s974] sm:$0xf]
      %v976 = vld [vmem:[%s974 + $0x4] sm:$0xf]
      %v978 = vunpack.c.l.b16 %v973
      %v979 = vpack.c.b16 %v978, %v978
      %vm980 = vsmask.f32 6400
      %v982 = vshrl.u32 %v851, 16
      %v984 = vrot.slane %v982, 1
      %v985 = vshll.u32 %v851, 16
      %v987 = vrot.slane %v985, 2
      %v988 = vor.u32 %v984, %v987
      %v990 = vshrl.u32 %v852, 16
      %v992 = vrot.slane %v990, 1
      %v993 = vshll.u32 %v852, 16
      %v995 = vrot.slane %v993, 2
      %v996 = vor.u32 %v992, %v995
      %v997 = vsel %vm980, %v988, %v996
      %v999 = vshrl.u32 %v853, 16
      %v1001 = vrot.slane %v999, 1
      %v1002 = vshll.u32 %v853, 16
      %v1004 = vrot.slane %v1002, 2
      %v1005 = vor.u32 %v1001, %v1004
      %v1006 = vsel %vm980, %v996, %v1005
      %v1008 = vshrl.u32 %v854, 16
      %v1010 = vrot.slane %v1008, 1
      %v1011 = vshll.u32 %v854, 16
      %v1013 = vrot.slane %v1011, 2
      %v1014 = vor.u32 %v1010, %v1013
      %v1015 = vsel %vm980, %v1005, %v1014
      %v1017 = vshrl.u32 %v855, 16
      %v1019 = vrot.slane %v1017, 1
      %v1020 = vshll.u32 %v855, 16
      %v1022 = vrot.slane %v1020, 2
      %v1023 = vor.u32 %v1019, %v1022
      %v1024 = vsel %vm980, %v1014, %v1023
      %v1026 = vshrl.u32 %v979, 16
      %v1028 = vrot.slane %v1026, 1
      %v1029 = vshll.u32 %v979, 16
      %v1031 = vrot.slane %v1029, 2
      %v1032 = vor.u32 %v1028, %v1031
      %v1033 = vsel %vm980, %v1023, %v1032
      %v1036 = vunpack.c.l.b16 %v975
      %v1037 = vunpack.c.l.b16 %v976
      %v1038 = vpack.c.b16 %v1037, %v1036
      %v1041 = vsel %vm637, %v997, 0
      %v1044 = vsel %vm637, %v1006, 0
      %v1047 = vsel %vm637, %v1015, 0
      %v1050 = vsel %vm637, %v1024, 0
      %v1053 = vsel %vm637, %v1033, 0
      %1055 = vmatprep.subr.bf16.mxu0 0
      %1056 = vmatpush1.bf16.msra.mxu0 0
      %1057 = vmatprep.subr.bf16.mxu0 0
      %1058 = vmatpush1.bf16.msra.mxu0 0
      %1059 = vmatprep.subr.bf16.mxu0 0
      %1060 = vmatpush1.bf16.msra.mxu0 0
      %1061 = vmatprep.subr.bf16.mxu0 0
      %1062 = vmatpush1.bf16.msra.mxu0 0
      %1063 = vmatprep.subr.bf16.mxu0 0
      %1064 = vmatpush1.bf16.msra.mxu0 0
      %1065 = vmatprep.subr.bf16.mxu0 0
      %1066 = vmatpush1.bf16.msra.mxu0 0
      %1067 = vmatprep.subr.bf16.mxu0 0
      %1068 = vmatpush1.bf16.msra.mxu0 0
      %1069 = vmatprep.subr.bf16.mxu0 0
      %1070 = vmatpush1.bf16.msra.mxu0 %v1038
      %1071 = vmatprep.subr.bf16.mxu0 0
      %1072 = vmatpush2.bf16.msra.mxu0 0
      %1073 = vmatprep.subr.bf16.mxu0 0
      %1074 = vmatpush2.bf16.msra.mxu0 0
      %1075 = vmatprep.subr.bf16.mxu0 0
      %1076 = vmatpush2.bf16.msra.mxu0 0
      %1077 = vmatprep.subr.bf16.mxu0 0
      %1078 = vmatpush2.bf16.msra.mxu0 0
      %1079 = vmatprep.subr.bf16.mxu0 0
      %1080 = vmatpush2.bf16.msra.mxu0 0
      %1081 = vmatprep.subr.bf16.mxu0 0
      %1082 = vmatpush2.bf16.msra.mxu0 0
      %1083 = vmatprep.subr.bf16.mxu0 0
      %1084 = vmatpush2.bf16.msra.mxu0 0
      %1085 = vmatprep.subr.bf16.mxu0 0
      %1086 = vmatpush2.bf16.msra.mxu0 0
      %1087 = vmatprep.mubr.bf16.mxu0 0
      %1088 = vmatmul.mubr.bf16.gmra.mxu0 %v1041
      %v1089 = vpop.f32.mrf.mxu0
      %v1090 = vadd.f32 0.0, %v1089
      %v1091 = vpop.f32.mrf.mxu0
      %v1092 = vpop.f32.mrf.mxu0
      %v1093 = vadd.f32 0.0, %v1092
      %v1094 = vpop.f32.mrf.mxu0
      %1095 = vmatprep.mubr.bf16.mxu0 0
      %1096 = vmatmul.mubr.bf16.gmra.mxu0 %v1044
      %v1097 = vpop.f32.mrf.mxu0
      %v1098 = vadd.f32 0.0, %v1097
      %v1099 = vpop.f32.mrf.mxu0
      %v1100 = vpop.f32.mrf.mxu0
      %v1101 = vadd.f32 0.0, %v1100
      %v1102 = vpop.f32.mrf.mxu0
      %1103 = vmatprep.mubr.bf16.mxu0 0
      %1104 = vmatmul.mubr.bf16.gmra.mxu0 %v1047
      %v1105 = vpop.f32.mrf.mxu0
      %v1106 = vadd.f32 0.0, %v1105
      %v1107 = vpop.f32.mrf.mxu0
      %v1108 = vpop.f32.mrf.mxu0
      %v1109 = vadd.f32 0.0, %v1108
      %v1110 = vpop.f32.mrf.mxu0
      %1111 = vmatprep.mubr.bf16.mxu0 0
      %1112 = vmatmul.mubr.bf16.gmra.mxu0 %v1050
      %v1113 = vpop.f32.mrf.mxu0
      %v1114 = vadd.f32 0.0, %v1113
      %v1115 = vpop.f32.mrf.mxu0
      %v1116 = vpop.f32.mrf.mxu0
      %v1117 = vadd.f32 0.0, %v1116
      %v1118 = vpop.f32.mrf.mxu0
      %1119 = vmatprep.mubr.bf16.mxu0 0
      %1120 = vmatmul.mubr.bf16.gmra.mxu0 %v1053
      %v1121 = vpop.f32.mrf.mxu0
      %v1122 = vadd.f32 0.0, %v1121
      %v1123 = vpop.f32.mrf.mxu0
      %v1124 = vpop.f32.mrf.mxu0
      %v1125 = vadd.f32 0.0, %v1124
      %v1126 = vpop.f32.mrf.mxu0
      %1127 = vdwg.mxu0
      %v1128 = vadd.f32 %v963, %v1090
      %v1129 = vadd.f32 %v964, %v1093
      %v1130 = vadd.f32 %v965, %v1098
      %v1131 = vadd.f32 %v966, %v1101
      %v1132 = vadd.f32 %v967, %v1106
      %v1133 = vadd.f32 %v968, %v1109
      %v1134 = vadd.f32 %v969, %v1114
      %v1135 = vadd.f32 %v970, %v1117
      %v1136 = vadd.f32 %v971, %v1122
      %v1137 = vadd.f32 %v972, %v1125
      %v1138 = vld [vmem:[%s2] sm:$0x1]
      %v1140 = vlaneseq
      %v1141 = vshrl.u32 %v1140, 7
      %v1142 = vsub.s32 0, %v1141
      %v1143 = vrot.slane %v1138, %v1142
      %v1145 = vmul.f32 %v1128, %v1143
      %v1146 = vmul.f32 %v1129, %v1143
      %v1147 = vmul.f32 %v1130, %v1143
      %v1148 = vmul.f32 %v1131, %v1143
      %v1149 = vmul.f32 %v1132, %v1143
      %v1150 = vmul.f32 %v1133, %v1143
      %v1151 = vmul.f32 %v1134, %v1143
      %v1152 = vmul.f32 %v1135, %v1143
      %v1153 = vmul.f32 %v1136, %v1143
      %v1154 = vmul.f32 %v1137, %v1143
      %v1155 = vld [vmem:[%s3] sm:$0x1]
      %v1157 = vlaneseq
      %v1158 = vshrl.u32 %v1157, 7
      %v1159 = vsub.s32 0, %v1158
      %v1160 = vrot.slane %v1155, %v1159
      %v1162 = vadd.f32 %v1145, %v1160
      %v1163 = vadd.f32 %v1146, %v1160
      %v1164 = vadd.f32 %v1147, %v1160
      %v1165 = vadd.f32 %v1148, %v1160
      %v1166 = vadd.f32 %v1149, %v1160
      %v1167 = vadd.f32 %v1150, %v1160
      %v1168 = vadd.f32 %v1151, %v1160
      %v1169 = vadd.f32 %v1152, %v1160
      %v1170 = vadd.f32 %v1153, %v1160
      %v1171 = vadd.f32 %v1154, %v1160
      %v1172 = vmax.f32 %v1162, 0.0
      %v1173 = vmax.f32 %v1163, 0.0
      %v1174 = vmax.f32 %v1164, 0.0
      %v1175 = vmax.f32 %v1165, 0.0
      %v1176 = vmax.f32 %v1166, 0.0
      %v1177 = vmax.f32 %v1167, 0.0
      %v1178 = vmax.f32 %v1168, 0.0
      %v1179 = vmax.f32 %v1169, 0.0
      %v1180 = vmax.f32 %v1170, 0.0
      %v1181 = vmax.f32 %v1171, 0.0
      %v1182 = vsel %vm532, 1, 0
      %v1183 = vsel %vm533, 1, 0
      %v1184 = vsel %vm534, 1, 0
      %v1185 = vsel %vm535, 1, 0
      %v1186 = vsel %vm536, 1, 0
      %v1187 = vsel %vm537, 1, 0
      %v1188 = vsel %vm538, 1, 0
      %v1189 = vsel %vm539, 1, 0
      %v1190 = vsel %vm540, 1, 0
      %v1191 = vsel %vm541, 1, 0
      %vm1192 = vcmp.eq.s32.totalorder %v1182, 1
      %vm1193 = vcmp.eq.s32.totalorder %v1183, 1
      %vm1194 = vcmp.eq.s32.totalorder %v1184, 1
      %vm1195 = vcmp.eq.s32.totalorder %v1185, 1
      %vm1196 = vcmp.eq.s32.totalorder %v1186, 1
      %vm1197 = vcmp.eq.s32.totalorder %v1187, 1
      %vm1198 = vcmp.eq.s32.totalorder %v1188, 1
      %vm1199 = vcmp.eq.s32.totalorder %v1189, 1
      %vm1200 = vcmp.eq.s32.totalorder %v1190, 1
      %vm1201 = vcmp.eq.s32.totalorder %v1191, 1
      %v1202 = vsel %vm1192, %v1172, 0.0
      %v1203 = vsel %vm1193, %v1173, 0.0
      %v1204 = vsel %vm1194, %v1174, 0.0
      %v1205 = vsel %vm1195, %v1175, 0.0
      %v1206 = vsel %vm1196, %v1176, 0.0
      %v1207 = vsel %vm1197, %v1177, 0.0
      %v1208 = vsel %vm1198, %v1178, 0.0
      %v1209 = vsel %vm1199, %v1179, 0.0
      %v1210 = vsel %vm1200, %v1180, 0.0
      %v1211 = vsel %vm1201, %v1181, 0.0
      %v1212 = vld [vmem:[%s7] sm:$0x3]
      %vm1213 = vcmask 31744
      %v1214 = vsel %vm1213, %v580, 0
      %v1216 = vsel %vm1213, %v581, 0
      %v1218 = vsel %vm1213, %v582, 0
      %v1220 = vsel %vm1213, %v583, 0
      %v1222 = vsel %vm1213, %v584, 0
      %vm1224 = vcmask 1041408
      %v1226 = vsel %vm1224, %v1212, 0
      %1228 = vmatprep.subr.bf16.mxu0 0
      %1229 = vmatpush1.bf16.msra.mxu0 0
      %1230 = vmatprep.subr.bf16.mxu0 0
      %1231 = vmatpush1.bf16.msra.mxu0 0
      %1232 = vmatprep.subr.bf16.mxu0 0
      %1233 = vmatpush1.bf16.msra.mxu0 0
      %1234 = vmatprep.subr.bf16.mxu0 0
      %1235 = vmatpush1.bf16.msra.mxu0 0
      %1236 = vmatprep.subr.bf16.mxu0 0
      %1237 = vmatpush1.bf16.msra.mxu0 0
      %1238 = vmatprep.subr.bf16.mxu0 0
      %1239 = vmatpush1.bf16.msra.mxu0 0
      %1240 = vmatprep.subr.bf16.mxu0 0
      %1241 = vmatpush1.bf16.msra.mxu0 0
      %1242 = vmatprep.subr.bf16.mxu0 0
      %1243 = vmatpush1.bf16.msra.mxu0 %v1226
      %1244 = vmatprep.subr.bf16.mxu0 0
      %1245 = vmatpush2.bf16.msra.mxu0 0
      %1246 = vmatprep.subr.bf16.mxu0 0
      %1247 = vmatpush2.bf16.msra.mxu0 0
      %1248 = vmatprep.subr.bf16.mxu0 0
      %1249 = vmatpush2.bf16.msra.mxu0 0
      %1250 = vmatprep.subr.bf16.mxu0 0
      %1251 = vmatpush2.bf16.msra.mxu0 0
      %1252 = vmatprep.subr.bf16.mxu0 0
      %1253 = vmatpush2.bf16.msra.mxu0 0
      %1254 = vmatprep.subr.bf16.mxu0 0
      %1255 = vmatpush2.bf16.msra.mxu0 0
      %1256 = vmatprep.subr.bf16.mxu0 0
      %1257 = vmatpush2.bf16.msra.mxu0 0
      %1258 = vmatprep.subr.bf16.mxu0 0
      %1259 = vmatpush2.bf16.msra.mxu0 0
      %1260 = vmatprep.mubr.bf16.mxu0 0
      %1261 = vmatmul.mubr.bf16.gmra.mxu0 %v1214
      %v1262 = vpop.f32.mrf.mxu0
      %v1263 = vadd.f32 0.0, %v1262
      %v1264 = vpop.f32.mrf.mxu0
      %v1265 = vpop.f32.mrf.mxu0
      %v1266 = vadd.f32 0.0, %v1265
      %v1267 = vpop.f32.mrf.mxu0
      %1268 = vmatprep.mubr.bf16.mxu0 0
      %1269 = vmatmul.mubr.bf16.gmra.mxu0 %v1216
      %v1270 = vpop.f32.mrf.mxu0
      %v1271 = vadd.f32 0.0, %v1270
      %v1272 = vpop.f32.mrf.mxu0
      %v1273 = vpop.f32.mrf.mxu0
      %v1274 = vadd.f32 0.0, %v1273
      %v1275 = vpop.f32.mrf.mxu0
      %1276 = vmatprep.mubr.bf16.mxu0 0
      %1277 = vmatmul.mubr.bf16.gmra.mxu0 %v1218
      %v1278 = vpop.f32.mrf.mxu0
      %v1279 = vadd.f32 0.0, %v1278
      %v1280 = vpop.f32.mrf.mxu0
      %v1281 = vpop.f32.mrf.mxu0
      %v1282 = vadd.f32 0.0, %v1281
      %v1283 = vpop.f32.mrf.mxu0
      %1284 = vmatprep.mubr.bf16.mxu0 0
      %1285 = vmatmul.mubr.bf16.gmra.mxu0 %v1220
      %v1286 = vpop.f32.mrf.mxu0
      %v1287 = vadd.f32 0.0, %v1286
      %v1288 = vpop.f32.mrf.mxu0
      %v1289 = vpop.f32.mrf.mxu0
      %v1290 = vadd.f32 0.0, %v1289
      %v1291 = vpop.f32.mrf.mxu0
      %1292 = vmatprep.mubr.bf16.mxu0 0
      %1293 = vmatmul.mubr.bf16.gmra.mxu0 %v1222
      %v1294 = vpop.f32.mrf.mxu0
      %v1295 = vadd.f32 0.0, %v1294
      %v1296 = vpop.f32.mrf.mxu0
      %v1297 = vpop.f32.mrf.mxu0
      %v1298 = vadd.f32 0.0, %v1297
      %v1299 = vpop.f32.mrf.mxu0
      %1300 = vdwg.mxu0
      %v1301 = vld [vmem:[%s8] sm:$0x1]
      %v1303 = vlaneseq
      %v1304 = vshrl.u32 %v1303, 7
      %v1305 = vsub.s32 0, %v1304
      %v1306 = vrot.slane %v1301, %v1305
      %v1308 = vmul.f32 %v1263, %v1306
      %v1309 = vmul.f32 %v1266, %v1306
      %v1310 = vmul.f32 %v1271, %v1306
      %v1311 = vmul.f32 %v1274, %v1306
      %v1312 = vmul.f32 %v1279, %v1306
      %v1313 = vmul.f32 %v1282, %v1306
      %v1314 = vmul.f32 %v1287, %v1306
      %v1315 = vmul.f32 %v1290, %v1306
      %v1316 = vmul.f32 %v1295, %v1306
      %v1317 = vmul.f32 %v1298, %v1306
      %v1318 = vld [vmem:[%s9] sm:$0x1]
      %v1320 = vlaneseq
      %v1321 = vshrl.u32 %v1320, 7
      %v1322 = vsub.s32 0, %v1321
      %v1323 = vrot.slane %v1318, %v1322
      %v1325 = vadd.f32 %v1308, %v1323
      %v1326 = vadd.f32 %v1309, %v1323
      %v1327 = vadd.f32 %v1310, %v1323
      %v1328 = vadd.f32 %v1311, %v1323
      %v1329 = vadd.f32 %v1312, %v1323
      %v1330 = vadd.f32 %v1313, %v1323
      %v1331 = vadd.f32 %v1314, %v1323
      %v1332 = vadd.f32 %v1315, %v1323
      %v1333 = vadd.f32 %v1316, %v1323
      %v1334 = vadd.f32 %v1317, %v1323
      %vm1335 = vcmask 60416
      %1336 = vst.msk [vmem:[#allocation2] sm:$0xf] %vm1335, 0
      %vm1337 = vcmask 58368
      %vm1338 = vsmask.f32 1280
      %vm1339 = vmand %vm1337, %vm1338
      %v1340 = vld [vmem:[#allocation2 + $0x4] sm:$0x3]
      %v1341 = vsel %vm1339, 0, %v1340
      %1342 = vst [vmem:[#allocation2 + $0x4] sm:$0x3] %v1341
      %vm1343 = vcmask 60417
      %vm1344 = vsmask.f32 7942
      %vm1345 = vmand %vm1343, %vm1344
      %v1346 = vld [vmem:[#allocation2 + $0x2c] sm:$0xe]
      %v1347 = vsel %vm1345, 0, %v1346
      %1348 = vst [vmem:[#allocation2 + $0x2c] sm:$0xe] %v1347
      %1349 = vst.msk [vmem:[#allocation2 + $0x30] sm:$0xf] %vm1335, 0
      %v1350 = vpack.c.bf16 %v1203, %v1202
      %v1351 = vpack.c.bf16 %v1205, %v1204
      %v1352 = vpack.c.bf16 %v1207, %v1206
      %v1353 = vpack.c.bf16 %v1209, %v1208
      %v1354 = vpack.c.bf16 %v1211, %v1210
      %v1360 = vunpack.c.l.b16 %v1350
      %v1361 = vunpack.c.h.b16 %v1350
      %v1362 = vunpack.c.l.b16 %v1351
      %v1363 = vunpack.c.h.b16 %v1351
      %v1364 = vunpack.c.l.b16 %v1352
      %v1365 = vunpack.c.h.b16 %v1352
      %v1366 = vunpack.c.l.b16 %v1353
      %v1367 = vunpack.c.h.b16 %v1353
      %v1368 = vunpack.c.l.b16 %v1354
      %v1369 = vunpack.c.h.b16 %v1354
      %v1370 = vpack.c.b16 %v1360, %v1360
      %v1371 = vpack.c.b16 %v1361, %v1361
      %v1372 = vpack.c.b16 %v1362, %v1362
      %v1373 = vpack.c.b16 %v1363, %v1363
      %v1374 = vpack.c.b16 %v1364, %v1364
      %v1375 = vpack.c.b16 %v1365, %v1365
      %v1376 = vpack.c.b16 %v1366, %v1366
      %v1377 = vpack.c.b16 %v1367, %v1367
      %v1378 = vpack.c.b16 %v1368, %v1368
      %v1379 = vpack.c.b16 %v1369, %v1369
      %vm1380 = vsmask.f32 5392
      %vm1381 = vmor %vm1338, %vm1380
      %v1383 = vshrl.u32 %v1370, 16
      %v1385 = vrot.slane %v1383, 6
      %v1386 = vshll.u32 %v1370, 16
      %v1388 = vrot.slane %v1386, 7
      %v1389 = vor.u32 %v1385, %v1388
      %v1390 = vrot.slane %v1389, 4
      %v1392 = vshrl.u32 %v1371, 16
      %v1394 = vrot.slane %v1392, 6
      %v1395 = vshll.u32 %v1371, 16
      %v1397 = vrot.slane %v1395, 7
      %v1398 = vor.u32 %v1394, %v1397
      %v1399 = vsel %vm1381, %v1390, %v1398
      %v1400 = vrot.slane %v1398, 4
      %v1402 = vshrl.u32 %v1372, 16
      %v1404 = vrot.slane %v1402, 6
      %v1405 = vshll.u32 %v1372, 16
      %v1407 = vrot.slane %v1405, 7
      %v1408 = vor.u32 %v1404, %v1407
      %v1409 = vsel %vm1381, %v1400, %v1408
      %v1410 = vrot.slane %v1408, 4
      %v1412 = vshrl.u32 %v1373, 16
      %v1414 = vrot.slane %v1412, 6
      %v1415 = vshll.u32 %v1373, 16
      %v1417 = vrot.slane %v1415, 7
      %v1418 = vor.u32 %v1414, %v1417
      %v1419 = vsel %vm1381, %v1410, %v1418
      %v1420 = vrot.slane %v1418, 4
      %v1422 = vshrl.u32 %v1374, 16
      %v1424 = vrot.slane %v1422, 6
      %v1425 = vshll.u32 %v1374, 16
      %v1427 = vrot.slane %v1425, 7
      %v1428 = vor.u32 %v1424, %v1427
      %v1429 = vsel %vm1381, %v1420, %v1428
      %v1430 = vrot.slane %v1428, 4
      %v1432 = vshrl.u32 %v1375, 16
      %v1434 = vrot.slane %v1432, 6
      %v1435 = vshll.u32 %v1375, 16
      %v1437 = vrot.slane %v1435, 7
      %v1438 = vor.u32 %v1434, %v1437
      %v1439 = vsel %vm1381, %v1430, %v1438
      %v1440 = vrot.slane %v1438, 4
      %v1442 = vshrl.u32 %v1376, 16
      %v1444 = vrot.slane %v1442, 6
      %v1445 = vshll.u32 %v1376, 16
      %v1447 = vrot.slane %v1445, 7
      %v1448 = vor.u32 %v1444, %v1447
      %v1449 = vsel %vm1381, %v1440, %v1448
      %v1450 = vrot.slane %v1448, 4
      %v1452 = vshrl.u32 %v1377, 16
      %v1454 = vrot.slane %v1452, 6
      %v1455 = vshll.u32 %v1377, 16
      %v1457 = vrot.slane %v1455, 7
      %v1458 = vor.u32 %v1454, %v1457
      %v1459 = vsel %vm1381, %v1450, %v1458
      %v1460 = vrot.slane %v1458, 4
      %v1462 = vshrl.u32 %v1378, 16
      %v1464 = vrot.slane %v1462, 6
      %v1465 = vshll.u32 %v1378, 16
      %v1467 = vrot.slane %v1465, 7
      %v1468 = vor.u32 %v1464, %v1467
      %v1469 = vsel %vm1381, %v1460, %v1468
      %v1470 = vrot.slane %v1468, 4
      %v1472 = vshrl.u32 %v1379, 16
      %v1474 = vrot.slane %v1472, 6
      %v1475 = vshll.u32 %v1379, 16
      %v1477 = vrot.slane %v1475, 7
      %v1478 = vor.u32 %v1474, %v1477
      %v1479 = vsel %vm1381, %v1470, %v1478
      %v1480 = vrot.slane %v1478, 4
      %v1492 = vld [vmem:[#allocation2 + $0x4] sm:$0xe]
      %v1493 = vsel %vm1345, %v1389, %v1492
      %1494 = vst [vmem:[#allocation2 + $0x4] sm:$0xe] %v1493
      %1495 = vst.msk [vmem:[#allocation2 + $0x8] sm:$0xf] %vm1335, %v1399
      %1496 = vst.msk [vmem:[#allocation2 + $0xc] sm:$0xf] %vm1335, %v1409
      %1497 = vst.msk [vmem:[#allocation2 + $0x10] sm:$0xf] %vm1335, %v1419
      %1498 = vst.msk [vmem:[#allocation2 + $0x14] sm:$0xf] %vm1335, %v1429
      %1499 = vst.msk [vmem:[#allocation2 + $0x18] sm:$0xf] %vm1335, %v1439
      %1500 = vst.msk [vmem:[#allocation2 + $0x1c] sm:$0xf] %vm1335, %v1449
      %1501 = vst.msk [vmem:[#allocation2 + $0x20] sm:$0xf] %vm1335, %v1459
      %1502 = vst.msk [vmem:[#allocation2 + $0x24] sm:$0xf] %vm1335, %v1469
      %1503 = vst.msk [vmem:[#allocation2 + $0x28] sm:$0xf] %vm1335, %v1479
      %v1504 = vld [vmem:[#allocation2 + $0x2c] sm:$0x3]
      %v1505 = vsel %vm1339, %v1480, %v1504
      %1506 = vst [vmem:[#allocation2 + $0x2c] sm:$0x3] %v1505
      %v1507 = vld [vmem:[#allocation2] sm:$0xf]
      %v1508 = vld [vmem:[#allocation2 + $0x4] sm:$0xf]
      %v1509 = vld [vmem:[#allocation2 + $0x8] sm:$0xf]
      %v1510 = vld [vmem:[#allocation2 + $0xc] sm:$0xf]
      %v1511 = vld [vmem:[#allocation2 + $0x10] sm:$0xf]
      %v1512 = vld [vmem:[#allocation2 + $0x14] sm:$0xf]
      %v1513 = vld [vmem:[#allocation2 + $0x18] sm:$0xf]
      %v1514 = vld [vmem:[#allocation2 + $0x1c] sm:$0xf]
      %v1515 = vld [vmem:[#allocation2 + $0x20] sm:$0xf]
      %v1516 = vld [vmem:[#allocation2 + $0x24] sm:$0xf]
      %v1517 = vld [vmem:[%s4] sm:$0xf]
      %v1518 = vld [vmem:[#allocation2 + $0x28] sm:$0x1]
      %s1519 = scalar_lea.vmem %s4, 4
      %v1520 = vld [vmem:[%s1519] sm:$0xf]
      %v1532 = vunpack.c.l.b16 %v1507
      %v1533 = vunpack.c.l.b16 %v1508
      %v1534 = vunpack.c.l.b16 %v1509
      %v1535 = vunpack.c.l.b16 %v1510
      %v1536 = vunpack.c.l.b16 %v1511
      %v1537 = vunpack.c.l.b16 %v1512
      %v1538 = vunpack.c.l.b16 %v1513
      %v1539 = vunpack.c.l.b16 %v1514
      %v1540 = vunpack.c.l.b16 %v1515
      %v1541 = vunpack.c.l.b16 %v1516
      %v1542 = vunpack.c.l.b16 %v1518
      %v1543 = vpack.c.b16 %v1533, %v1532
      %v1544 = vpack.c.b16 %v1535, %v1534
      %v1545 = vpack.c.b16 %v1537, %v1536
      %v1546 = vpack.c.b16 %v1539, %v1538
      %v1547 = vpack.c.b16 %v1541, %v1540
      %v1548 = vpack.c.b16 %v1542, %v1542
      %v1550 = vshrl.u32 %v1543, 16
      %v1552 = vshll.u32 %v1543, 16
      %v1554 = vrot.slane %v1552, 1
      %v1555 = vor.u32 %v1550, %v1554
      %v1557 = vshll.u32 %v1544, 16
      %v1559 = vrot.slane %v1557, 1
      %v1560 = vsel %vm586, %v1555, %v1559
      %v1561 = vshrl.u32 %v1544, 16
      %v1563 = vor.u32 %v1561, %v1559
      %v1565 = vshll.u32 %v1545, 16
      %v1567 = vrot.slane %v1565, 1
      %v1568 = vsel %vm586, %v1563, %v1567
      %v1569 = vshrl.u32 %v1545, 16
      %v1571 = vor.u32 %v1569, %v1567
      %v1573 = vshll.u32 %v1546, 16
      %v1575 = vrot.slane %v1573, 1
      %v1576 = vsel %vm586, %v1571, %v1575
      %v1577 = vshrl.u32 %v1546, 16
      %v1579 = vor.u32 %v1577, %v1575
      %v1581 = vshll.u32 %v1547, 16
      %v1583 = vrot.slane %v1581, 1
      %v1584 = vsel %vm586, %v1579, %v1583
      %v1585 = vshrl.u32 %v1547, 16
      %v1587 = vor.u32 %v1585, %v1583
      %v1589 = vshll.u32 %v1548, 16
      %v1591 = vrot.slane %v1589, 1
      %v1592 = vsel %vm586, %v1587, %v1591
      %vm1593 = vcmask 64512
      %v1595 = vsel %vm1593, %v1560, 0
      %v1598 = vsel %vm1593, %v1568, 0
      %v1601 = vsel %vm1593, %v1576, 0
      %v1604 = vsel %vm1593, %v1584, 0
      %v1607 = vsel %vm1593, %v1592, 0
      %vm1609 = vcmask 1043456
      %v1611 = vsel %vm1609, %v1520, 0
      %1613 = vmatprep.subr.bf16.mxu0 0
      %1614 = vmatpush1.bf16.msra.mxu0 0
      %1615 = vmatprep.subr.bf16.mxu0 0
      %1616 = vmatpush1.bf16.msra.mxu0 0
      %1617 = vmatprep.subr.bf16.mxu0 0
      %1618 = vmatpush1.bf16.msra.mxu0 0
      %1619 = vmatprep.subr.bf16.mxu0 0
      %1620 = vmatpush1.bf16.msra.mxu0 0
      %1621 = vmatprep.subr.bf16.mxu0 0
      %1622 = vmatpush1.bf16.msra.mxu0 0
      %1623 = vmatprep.subr.bf16.mxu0 0
      %1624 = vmatpush1.bf16.msra.mxu0 0
      %1625 = vmatprep.subr.bf16.mxu0 0
      %1626 = vmatpush1.bf16.msra.mxu0 0
      %1627 = vmatprep.subr.bf16.mxu0 0
      %1628 = vmatpush1.bf16.msra.mxu0 %v1611
      %1629 = vmatprep.subr.bf16.mxu0 0
      %1630 = vmatpush2.bf16.msra.mxu0 0
      %1631 = vmatprep.subr.bf16.mxu0 0
      %1632 = vmatpush2.bf16.msra.mxu0 0
      %1633 = vmatprep.subr.bf16.mxu0 0
      %1634 = vmatpush2.bf16.msra.mxu0 0
      %1635 = vmatprep.subr.bf16.mxu0 0
      %1636 = vmatpush2.bf16.msra.mxu0 0
      %1637 = vmatprep.subr.bf16.mxu0 0
      %1638 = vmatpush2.bf16.msra.mxu0 0
      %1639 = vmatprep.subr.bf16.mxu0 0
      %1640 = vmatpush2.bf16.msra.mxu0 0
      %1641 = vmatprep.subr.bf16.mxu0 0
      %1642 = vmatpush2.bf16.msra.mxu0 0
      %1643 = vmatprep.subr.bf16.mxu0 0
      %1644 = vmatpush2.bf16.msra.mxu0 0
      %1645 = vmatprep.mubr.bf16.mxu0 0
      %1646 = vmatmul.mubr.bf16.gmra.mxu0 %v1595
      %v1647 = vpop.f32.mrf.mxu0
      %v1648 = vadd.f32 0.0, %v1647
      %v1649 = vpop.f32.mrf.mxu0
      %v1650 = vpop.f32.mrf.mxu0
      %v1651 = vadd.f32 0.0, %v1650
      %v1652 = vpop.f32.mrf.mxu0
      %1653 = vmatprep.mubr.bf16.mxu0 0
      %1654 = vmatmul.mubr.bf16.gmra.mxu0 %v1598
      %v1655 = vpop.f32.mrf.mxu0
      %v1656 = vadd.f32 0.0, %v1655
      %v1657 = vpop.f32.mrf.mxu0
      %v1658 = vpop.f32.mrf.mxu0
      %v1659 = vadd.f32 0.0, %v1658
      %v1660 = vpop.f32.mrf.mxu0
      %1661 = vmatprep.mubr.bf16.mxu0 0
      %1662 = vmatmul.mubr.bf16.gmra.mxu0 %v1601
      %v1663 = vpop.f32.mrf.mxu0
      %v1664 = vadd.f32 0.0, %v1663
      %v1665 = vpop.f32.mrf.mxu0
      %v1666 = vpop.f32.mrf.mxu0
      %v1667 = vadd.f32 0.0, %v1666
      %v1668 = vpop.f32.mrf.mxu0
      %1669 = vmatprep.mubr.bf16.mxu0 0
      %1670 = vmatmul.mubr.bf16.gmra.mxu0 %v1604
      %v1671 = vpop.f32.mrf.mxu0
      %v1672 = vadd.f32 0.0, %v1671
      %v1673 = vpop.f32.mrf.mxu0
      %v1674 = vpop.f32.mrf.mxu0
      %v1675 = vadd.f32 0.0, %v1674
      %v1676 = vpop.f32.mrf.mxu0
      %1677 = vmatprep.mubr.bf16.mxu0 0
      %1678 = vmatmul.mubr.bf16.gmra.mxu0 %v1607
      %v1679 = vpop.f32.mrf.mxu0
      %v1680 = vadd.f32 0.0, %v1679
      %v1681 = vpop.f32.mrf.mxu0
      %v1682 = vpop.f32.mrf.mxu0
      %v1683 = vadd.f32 0.0, %v1682
      %v1684 = vpop.f32.mrf.mxu0
      %1685 = vdwg.mxu0
      %v1686 = vsel %vm1593, %v1543, 0
      %v1688 = vsel %vm1593, %v1544, 0
      %v1690 = vsel %vm1593, %v1545, 0
      %v1692 = vsel %vm1593, %v1546, 0
      %v1694 = vsel %vm1593, %v1547, 0
      %v1697 = vsel %vm1609, %v1517, 0
      %1699 = vmatprep.subr.bf16.mxu0 0
      %1700 = vmatpush1.bf16.msra.mxu0 0
      %1701 = vmatprep.subr.bf16.mxu0 0
      %1702 = vmatpush1.bf16.msra.mxu0 0
      %1703 = vmatprep.subr.bf16.mxu0 0
      %1704 = vmatpush1.bf16.msra.mxu0 0
      %1705 = vmatprep.subr.bf16.mxu0 0
      %1706 = vmatpush1.bf16.msra.mxu0 0
      %1707 = vmatprep.subr.bf16.mxu0 0
      %1708 = vmatpush1.bf16.msra.mxu0 0
      %1709 = vmatprep.subr.bf16.mxu0 0
      %1710 = vmatpush1.bf16.msra.mxu0 0
      %1711 = vmatprep.subr.bf16.mxu0 0
      %1712 = vmatpush1.bf16.msra.mxu0 0
      %1713 = vmatprep.subr.bf16.mxu0 0
      %1714 = vmatpush1.bf16.msra.mxu0 %v1697
      %1715 = vmatprep.subr.bf16.mxu0 0
      %1716 = vmatpush2.bf16.msra.mxu0 0
      %1717 = vmatprep.subr.bf16.mxu0 0
      %1718 = vmatpush2.bf16.msra.mxu0 0
      %1719 = vmatprep.subr.bf16.mxu0 0
      %1720 = vmatpush2.bf16.msra.mxu0 0
      %1721 = vmatprep.subr.bf16.mxu0 0
      %1722 = vmatpush2.bf16.msra.mxu0 0
      %1723 = vmatprep.subr.bf16.mxu0 0
      %1724 = vmatpush2.bf16.msra.mxu0 0
      %1725 = vmatprep.subr.bf16.mxu0 0
      %1726 = vmatpush2.bf16.msra.mxu0 0
      %1727 = vmatprep.subr.bf16.mxu0 0
      %1728 = vmatpush2.bf16.msra.mxu0 0
      %1729 = vmatprep.subr.bf16.mxu0 0
      %1730 = vmatpush2.bf16.msra.mxu0 0
      %1731 = vmatprep.mubr.bf16.mxu0 0
      %1732 = vmatmul.mubr.bf16.gmra.mxu0 %v1686
      %v1733 = vpop.f32.mrf.mxu0
      %v1734 = vadd.f32 %v1648, %v1733
      %v1735 = vpop.f32.mrf.mxu0
      %v1736 = vpop.f32.mrf.mxu0
      %v1737 = vadd.f32 %v1651, %v1736
      %v1738 = vpop.f32.mrf.mxu0
      %1739 = vmatprep.mubr.bf16.mxu0 0
      %1740 = vmatmul.mubr.bf16.gmra.mxu0 %v1688
      %v1741 = vpop.f32.mrf.mxu0
      %v1742 = vadd.f32 %v1656, %v1741
      %v1743 = vpop.f32.mrf.mxu0
      %v1744 = vpop.f32.mrf.mxu0
      %v1745 = vadd.f32 %v1659, %v1744
      %v1746 = vpop.f32.mrf.mxu0
      %1747 = vmatprep.mubr.bf16.mxu0 0
      %1748 = vmatmul.mubr.bf16.gmra.mxu0 %v1690
      %v1749 = vpop.f32.mrf.mxu0
      %v1750 = vadd.f32 %v1664, %v1749
      %v1751 = vpop.f32.mrf.mxu0
      %v1752 = vpop.f32.mrf.mxu0
      %v1753 = vadd.f32 %v1667, %v1752
      %v1754 = vpop.f32.mrf.mxu0
      %1755 = vmatprep.mubr.bf16.mxu0 0
      %1756 = vmatmul.mubr.bf16.gmra.mxu0 %v1692
      %v1757 = vpop.f32.mrf.mxu0
      %v1758 = vadd.f32 %v1672, %v1757
      %v1759 = vpop.f32.mrf.mxu0
      %v1760 = vpop.f32.mrf.mxu0
      %v1761 = vadd.f32 %v1675, %v1760
      %v1762 = vpop.f32.mrf.mxu0
      %1763 = vmatprep.mubr.bf16.mxu0 0
      %1764 = vmatmul.mubr.bf16.gmra.mxu0 %v1694
      %v1765 = vpop.f32.mrf.mxu0
      %v1766 = vadd.f32 %v1680, %v1765
      %v1767 = vpop.f32.mrf.mxu0
      %v1768 = vpop.f32.mrf.mxu0
      %v1769 = vadd.f32 %v1683, %v1768
      %v1770 = vpop.f32.mrf.mxu0
      %1771 = vdwg.mxu0
      %v1772 = vld [vmem:[#allocation2] sm:$0xe]
      %s1773 = scalar_lea.vmem %s4, 8
      %v1774 = vld [vmem:[%s1773] sm:$0xf]
      %v1776 = vunpack.c.l.b16 %v1772
      %v1777 = vpack.c.b16 %v1533, %v1776
      %v1778 = vrot.slane %v1777, 1
      %v1779 = vrot.slane %v1544, 1
      %v1780 = vsel %vm857, %v1778, %v1779
      %v1781 = vrot.slane %v1545, 1
      %v1782 = vsel %vm857, %v1779, %v1781
      %v1783 = vrot.slane %v1546, 1
      %v1784 = vsel %vm857, %v1781, %v1783
      %v1785 = vrot.slane %v1547, 1
      %v1786 = vsel %vm857, %v1783, %v1785
      %v1787 = vrot.slane %v1548, 1
      %v1788 = vsel %vm857, %v1785, %v1787
      %v1790 = vsel %vm1593, %v1780, 0
      %v1793 = vsel %vm1593, %v1782, 0
      %v1796 = vsel %vm1593, %v1784, 0
      %v1799 = vsel %vm1593, %v1786, 0
      %v1802 = vsel %vm1593, %v1788, 0
      %v1805 = vsel %vm1609, %v1774, 0
      %1807 = vmatprep.subr.bf16.mxu0 0
      %1808 = vmatpush1.bf16.msra.mxu0 0
      %1809 = vmatprep.subr.bf16.mxu0 0
      %1810 = vmatpush1.bf16.msra.mxu0 0
      %1811 = vmatprep.subr.bf16.mxu0 0
      %1812 = vmatpush1.bf16.msra.mxu0 0
      %1813 = vmatprep.subr.bf16.mxu0 0
      %1814 = vmatpush1.bf16.msra.mxu0 0
      %1815 = vmatprep.subr.bf16.mxu0 0
      %1816 = vmatpush1.bf16.msra.mxu0 0
      %1817 = vmatprep.subr.bf16.mxu0 0
      %1818 = vmatpush1.bf16.msra.mxu0 0
      %1819 = vmatprep.subr.bf16.mxu0 0
      %1820 = vmatpush1.bf16.msra.mxu0 0
      %1821 = vmatprep.subr.bf16.mxu0 0
      %1822 = vmatpush1.bf16.msra.mxu0 %v1805
      %1823 = vmatprep.subr.bf16.mxu0 0
      %1824 = vmatpush2.bf16.msra.mxu0 0
      %1825 = vmatprep.subr.bf16.mxu0 0
      %1826 = vmatpush2.bf16.msra.mxu0 0
      %1827 = vmatprep.subr.bf16.mxu0 0
      %1828 = vmatpush2.bf16.msra.mxu0 0
      %1829 = vmatprep.subr.bf16.mxu0 0
      %1830 = vmatpush2.bf16.msra.mxu0 0
      %1831 = vmatprep.subr.bf16.mxu0 0
      %1832 = vmatpush2.bf16.msra.mxu0 0
      %1833 = vmatprep.subr.bf16.mxu0 0
      %1834 = vmatpush2.bf16.msra.mxu0 0
      %1835 = vmatprep.subr.bf16.mxu0 0
      %1836 = vmatpush2.bf16.msra.mxu0 0
      %1837 = vmatprep.subr.bf16.mxu0 0
      %1838 = vmatpush2.bf16.msra.mxu0 0
      %1839 = vmatprep.mubr.bf16.mxu0 0
      %1840 = vmatmul.mubr.bf16.gmra.mxu0 %v1790
      %v1841 = vpop.f32.mrf.mxu0
      %v1842 = vadd.f32 0.0, %v1841
      %v1843 = vpop.f32.mrf.mxu0
      %v1844 = vpop.f32.mrf.mxu0
      %v1845 = vadd.f32 0.0, %v1844
      %v1846 = vpop.f32.mrf.mxu0
      %1847 = vmatprep.mubr.bf16.mxu0 0
      %1848 = vmatmul.mubr.bf16.gmra.mxu0 %v1793
      %v1849 = vpop.f32.mrf.mxu0
      %v1850 = vadd.f32 0.0, %v1849
      %v1851 = vpop.f32.mrf.mxu0
      %v1852 = vpop.f32.mrf.mxu0
      %v1853 = vadd.f32 0.0, %v1852
      %v1854 = vpop.f32.mrf.mxu0
      %1855 = vmatprep.mubr.bf16.mxu0 0
      %1856 = vmatmul.mubr.bf16.gmra.mxu0 %v1796
      %v1857 = vpop.f32.mrf.mxu0
      %v1858 = vadd.f32 0.0, %v1857
      %v1859 = vpop.f32.mrf.mxu0
      %v1860 = vpop.f32.mrf.mxu0
      %v1861 = vadd.f32 0.0, %v1860
      %v1862 = vpop.f32.mrf.mxu0
      %1863 = vmatprep.mubr.bf16.mxu0 0
      %1864 = vmatmul.mubr.bf16.gmra.mxu0 %v1799
      %v1865 = vpop.f32.mrf.mxu0
      %v1866 = vadd.f32 0.0, %v1865
      %v1867 = vpop.f32.mrf.mxu0
      %v1868 = vpop.f32.mrf.mxu0
      %v1869 = vadd.f32 0.0, %v1868
      %v1870 = vpop.f32.mrf.mxu0
      %1871 = vmatprep.mubr.bf16.mxu0 0
      %1872 = vmatmul.mubr.bf16.gmra.mxu0 %v1802
      %v1873 = vpop.f32.mrf.mxu0
      %v1874 = vadd.f32 0.0, %v1873
      %v1875 = vpop.f32.mrf.mxu0
      %v1876 = vpop.f32.mrf.mxu0
      %v1877 = vadd.f32 0.0, %v1876
      %v1878 = vpop.f32.mrf.mxu0
      %1879 = vdwg.mxu0
      %v1880 = vadd.f32 %v1734, %v1842
      %v1881 = vadd.f32 %v1737, %v1845
      %v1882 = vadd.f32 %v1742, %v1850
      %v1883 = vadd.f32 %v1745, %v1853
      %v1884 = vadd.f32 %v1750, %v1858
      %v1885 = vadd.f32 %v1753, %v1861
      %v1886 = vadd.f32 %v1758, %v1866
      %v1887 = vadd.f32 %v1761, %v1869
      %v1888 = vadd.f32 %v1766, %v1874
      %v1889 = vadd.f32 %v1769, %v1877
      %v1890 = vld [vmem:[#allocation2 + $0x4] sm:$0xe]
      %v1891 = vld [vmem:[#allocation2 + $0x8] sm:$0xf]
      %v1892 = vld [vmem:[#allocation2 + $0xc] sm:$0xf]
      %v1893 = vld [vmem:[#allocation2 + $0x10] sm:$0xf]
      %v1894 = vld [vmem:[#allocation2 + $0x14] sm:$0xf]
      %v1895 = vld [vmem:[#allocation2 + $0x18] sm:$0xf]
      %v1896 = vld [vmem:[#allocation2 + $0x1c] sm:$0xf]
      %v1897 = vld [vmem:[#allocation2 + $0x20] sm:$0xf]
      %v1898 = vld [vmem:[#allocation2 + $0x24] sm:$0xf]
      %v1899 = vld [vmem:[#allocation2 + $0x28] sm:$0xf]
      %v1900 = vld [vmem:[#allocation2 + $0x2c] sm:$0x1]
      %s1901 = scalar_lea.vmem %s4, 12
      %v1902 = vld [vmem:[%s1901] sm:$0xf]
      %v1914 = vunpack.c.l.b16 %v1890
      %v1915 = vunpack.c.l.b16 %v1891
      %v1916 = vunpack.c.l.b16 %v1892
      %v1917 = vunpack.c.l.b16 %v1893
      %v1918 = vunpack.c.l.b16 %v1894
      %v1919 = vunpack.c.l.b16 %v1895
      %v1920 = vunpack.c.l.b16 %v1896
      %v1921 = vunpack.c.l.b16 %v1897
      %v1922 = vunpack.c.l.b16 %v1898
      %v1923 = vunpack.c.l.b16 %v1899
      %v1924 = vunpack.c.l.b16 %v1900
      %v1925 = vpack.c.b16 %v1915, %v1914
      %v1926 = vpack.c.b16 %v1917, %v1916
      %v1927 = vpack.c.b16 %v1919, %v1918
      %v1928 = vpack.c.b16 %v1921, %v1920
      %v1929 = vpack.c.b16 %v1923, %v1922
      %v1930 = vpack.c.b16 %v1924, %v1924
      %v1931 = vrot.slane %v1925, 1
      %v1932 = vrot.slane %v1926, 1
      %v1933 = vsel %vm857, %v1931, %v1932
      %v1934 = vrot.slane %v1927, 1
      %v1935 = vsel %vm857, %v1932, %v1934
      %v1936 = vrot.slane %v1928, 1
      %v1937 = vsel %vm857, %v1934, %v1936
      %v1938 = vrot.slane %v1929, 1
      %v1939 = vsel %vm857, %v1936, %v1938
      %v1940 = vrot.slane %v1930, 1
      %v1941 = vsel %vm857, %v1938, %v1940
      %v1943 = vsel %vm1593, %v1933, 0
      %v1946 = vsel %vm1593, %v1935, 0
      %v1949 = vsel %vm1593, %v1937, 0
      %v1952 = vsel %vm1593, %v1939, 0
      %v1955 = vsel %vm1593, %v1941, 0
      %v1958 = vsel %vm1609, %v1902, 0
      %1960 = vmatprep.subr.bf16.mxu0 0
      %1961 = vmatpush1.bf16.msra.mxu0 0
      %1962 = vmatprep.subr.bf16.mxu0 0
      %1963 = vmatpush1.bf16.msra.mxu0 0
      %1964 = vmatprep.subr.bf16.mxu0 0
      %1965 = vmatpush1.bf16.msra.mxu0 0
      %1966 = vmatprep.subr.bf16.mxu0 0
      %1967 = vmatpush1.bf16.msra.mxu0 0
      %1968 = vmatprep.subr.bf16.mxu0 0
      %1969 = vmatpush1.bf16.msra.mxu0 0
      %1970 = vmatprep.subr.bf16.mxu0 0
      %1971 = vmatpush1.bf16.msra.mxu0 0
      %1972 = vmatprep.subr.bf16.mxu0 0
      %1973 = vmatpush1.bf16.msra.mxu0 0
      %1974 = vmatprep.subr.bf16.mxu0 0
      %1975 = vmatpush1.bf16.msra.mxu0 %v1958
      %1976 = vmatprep.subr.bf16.mxu0 0
      %1977 = vmatpush2.bf16.msra.mxu0 0
      %1978 = vmatprep.subr.bf16.mxu0 0
      %1979 = vmatpush2.bf16.msra.mxu0 0
      %1980 = vmatprep.subr.bf16.mxu0 0
      %1981 = vmatpush2.bf16.msra.mxu0 0
      %1982 = vmatprep.subr.bf16.mxu0 0
      %1983 = vmatpush2.bf16.msra.mxu0 0
      %1984 = vmatprep.subr.bf16.mxu0 0
      %1985 = vmatpush2.bf16.msra.mxu0 0
      %1986 = vmatprep.subr.bf16.mxu0 0
      %1987 = vmatpush2.bf16.msra.mxu0 0
      %1988 = vmatprep.subr.bf16.mxu0 0
      %1989 = vmatpush2.bf16.msra.mxu0 0
      %1990 = vmatprep.subr.bf16.mxu0 0
      %1991 = vmatpush2.bf16.msra.mxu0 0
      %1992 = vmatprep.mubr.bf16.mxu0 0
      %1993 = vmatmul.mubr.bf16.gmra.mxu0 %v1943
      %v1994 = vpop.f32.mrf.mxu0
      %v1995 = vadd.f32 0.0, %v1994
      %v1996 = vpop.f32.mrf.mxu0
      %v1997 = vpop.f32.mrf.mxu0
      %v1998 = vadd.f32 0.0, %v1997
      %v1999 = vpop.f32.mrf.mxu0
      %2000 = vmatprep.mubr.bf16.mxu0 0
      %2001 = vmatmul.mubr.bf16.gmra.mxu0 %v1946
      %v2002 = vpop.f32.mrf.mxu0
      %v2003 = vadd.f32 0.0, %v2002
      %v2004 = vpop.f32.mrf.mxu0
      %v2005 = vpop.f32.mrf.mxu0
      %v2006 = vadd.f32 0.0, %v2005
      %v2007 = vpop.f32.mrf.mxu0
      %2008 = vmatprep.mubr.bf16.mxu0 0
      %2009 = vmatmul.mubr.bf16.gmra.mxu0 %v1949
      %v2010 = vpop.f32.mrf.mxu0
      %v2011 = vadd.f32 0.0, %v2010
      %v2012 = vpop.f32.mrf.mxu0
      %v2013 = vpop.f32.mrf.mxu0
      %v2014 = vadd.f32 0.0, %v2013
      %v2015 = vpop.f32.mrf.mxu0
      %2016 = vmatprep.mubr.bf16.mxu0 0
      %2017 = vmatmul.mubr.bf16.gmra.mxu0 %v1952
      %v2018 = vpop.f32.mrf.mxu0
      %v2019 = vadd.f32 0.0, %v2018
      %v2020 = vpop.f32.mrf.mxu0
      %v2021 = vpop.f32.mrf.mxu0
      %v2022 = vadd.f32 0.0, %v2021
      %v2023 = vpop.f32.mrf.mxu0
      %2024 = vmatprep.mubr.bf16.mxu0 0
      %2025 = vmatmul.mubr.bf16.gmra.mxu0 %v1955
      %v2026 = vpop.f32.mrf.mxu0
      %v2027 = vadd.f32 0.0, %v2026
      %v2028 = vpop.f32.mrf.mxu0
      %v2029 = vpop.f32.mrf.mxu0
      %v2030 = vadd.f32 0.0, %v2029
      %v2031 = vpop.f32.mrf.mxu0
      %2032 = vdwg.mxu0
      %v2033 = vadd.f32 %v1880, %v1995
      %v2034 = vadd.f32 %v1881, %v1998
      %v2035 = vadd.f32 %v1882, %v2003
      %v2036 = vadd.f32 %v1883, %v2006
      %v2037 = vadd.f32 %v1884, %v2011
      %v2038 = vadd.f32 %v1885, %v2014
      %v2039 = vadd.f32 %v1886, %v2019
      %v2040 = vadd.f32 %v1887, %v2022
      %v2041 = vadd.f32 %v1888, %v2027
      %v2042 = vadd.f32 %v1889, %v2030
      %v2043 = vld [vmem:[#allocation2 + $0x2c] sm:$0x3]
      %s2044 = scalar_lea.vmem %s4, 16
      %v2045 = vld [vmem:[%s2044] sm:$0xf]
      %v2047 = vunpack.c.l.b16 %v2043
      %v2048 = vpack.c.b16 %v2047, %v2047
      %v2050 = vshrl.u32 %v1925, 16
      %v2052 = vrot.slane %v2050, 1
      %v2053 = vshll.u32 %v1925, 16
      %v2055 = vrot.slane %v2053, 2
      %v2056 = vor.u32 %v2052, %v2055
      %v2058 = vshrl.u32 %v1926, 16
      %v2060 = vrot.slane %v2058, 1
      %v2061 = vshll.u32 %v1926, 16
      %v2063 = vrot.slane %v2061, 2
      %v2064 = vor.u32 %v2060, %v2063
      %v2065 = vsel %vm980, %v2056, %v2064
      %v2067 = vshrl.u32 %v1927, 16
      %v2069 = vrot.slane %v2067, 1
      %v2070 = vshll.u32 %v1927, 16
      %v2072 = vrot.slane %v2070, 2
      %v2073 = vor.u32 %v2069, %v2072
      %v2074 = vsel %vm980, %v2064, %v2073
      %v2076 = vshrl.u32 %v1928, 16
      %v2078 = vrot.slane %v2076, 1
      %v2079 = vshll.u32 %v1928, 16
      %v2081 = vrot.slane %v2079, 2
      %v2082 = vor.u32 %v2078, %v2081
      %v2083 = vsel %vm980, %v2073, %v2082
      %v2085 = vshrl.u32 %v1929, 16
      %v2087 = vrot.slane %v2085, 1
      %v2088 = vshll.u32 %v1929, 16
      %v2090 = vrot.slane %v2088, 2
      %v2091 = vor.u32 %v2087, %v2090
      %v2092 = vsel %vm980, %v2082, %v2091
      %v2094 = vshrl.u32 %v2048, 16
      %v2096 = vrot.slane %v2094, 1
      %v2097 = vshll.u32 %v2048, 16
      %v2099 = vrot.slane %v2097, 2
      %v2100 = vor.u32 %v2096, %v2099
      %v2101 = vsel %vm980, %v2091, %v2100
      %v2103 = vsel %vm1593, %v2065, 0
      %v2106 = vsel %vm1593, %v2074, 0
      %v2109 = vsel %vm1593, %v2083, 0
      %v2112 = vsel %vm1593, %v2092, 0
      %v2115 = vsel %vm1593, %v2101, 0
      %v2118 = vsel %vm1609, %v2045, 0
      %2120 = vmatprep.subr.bf16.mxu0 0
      %2121 = vmatpush1.bf16.msra.mxu0 0
      %2122 = vmatprep.subr.bf16.mxu0 0
      %2123 = vmatpush1.bf16.msra.mxu0 0
      %2124 = vmatprep.subr.bf16.mxu0 0
      %2125 = vmatpush1.bf16.msra.mxu0 0
      %2126 = vmatprep.subr.bf16.mxu0 0
      %2127 = vmatpush1.bf16.msra.mxu0 0
      %2128 = vmatprep.subr.bf16.mxu0 0
      %2129 = vmatpush1.bf16.msra.mxu0 0
      %2130 = vmatprep.subr.bf16.mxu0 0
      %2131 = vmatpush1.bf16.msra.mxu0 0
      %2132 = vmatprep.subr.bf16.mxu0 0
      %2133 = vmatpush1.bf16.msra.mxu0 0
      %2134 = vmatprep.subr.bf16.mxu0 0
      %2135 = vmatpush1.bf16.msra.mxu0 %v2118
      %2136 = vmatprep.subr.bf16.mxu0 0
      %2137 = vmatpush2.bf16.msra.mxu0 0
      %2138 = vmatprep.subr.bf16.mxu0 0
      %2139 = vmatpush2.bf16.msra.mxu0 0
      %2140 = vmatprep.subr.bf16.mxu0 0
      %2141 = vmatpush2.bf16.msra.mxu0 0
      %2142 = vmatprep.subr.bf16.mxu0 0
      %2143 = vmatpush2.bf16.msra.mxu0 0
      %2144 = vmatprep.subr.bf16.mxu0 0
      %2145 = vmatpush2.bf16.msra.mxu0 0
      %2146 = vmatprep.subr.bf16.mxu0 0
      %2147 = vmatpush2.bf16.msra.mxu0 0
      %2148 = vmatprep.subr.bf16.mxu0 0
      %2149 = vmatpush2.bf16.msra.mxu0 0
      %2150 = vmatprep.subr.bf16.mxu0 0
      %2151 = vmatpush2.bf16.msra.mxu0 0
      %2152 = vmatprep.mubr.bf16.mxu0 0
      %2153 = vmatmul.mubr.bf16.gmra.mxu0 %v2103
      %v2154 = vpop.f32.mrf.mxu0
      %v2155 = vadd.f32 0.0, %v2154
      %v2156 = vpop.f32.mrf.mxu0
      %v2157 = vpop.f32.mrf.mxu0
      %v2158 = vadd.f32 0.0, %v2157
      %v2159 = vpop.f32.mrf.mxu0
      %2160 = vmatprep.mubr.bf16.mxu0 0
      %2161 = vmatmul.mubr.bf16.gmra.mxu0 %v2106
      %v2162 = vpop.f32.mrf.mxu0
      %v2163 = vadd.f32 0.0, %v2162
      %v2164 = vpop.f32.mrf.mxu0
      %v2165 = vpop.f32.mrf.mxu0
      %v2166 = vadd.f32 0.0, %v2165
      %v2167 = vpop.f32.mrf.mxu0
      %2168 = vmatprep.mubr.bf16.mxu0 0
      %2169 = vmatmul.mubr.bf16.gmra.mxu0 %v2109
      %v2170 = vpop.f32.mrf.mxu0
      %v2171 = vadd.f32 0.0, %v2170
      %v2172 = vpop.f32.mrf.mxu0
      %v2173 = vpop.f32.mrf.mxu0
      %v2174 = vadd.f32 0.0, %v2173
      %v2175 = vpop.f32.mrf.mxu0
      %2176 = vmatprep.mubr.bf16.mxu0 0
      %2177 = vmatmul.mubr.bf16.gmra.mxu0 %v2112
      %v2178 = vpop.f32.mrf.mxu0
      %v2179 = vadd.f32 0.0, %v2178
      %v2180 = vpop.f32.mrf.mxu0
      %v2181 = vpop.f32.mrf.mxu0
      %v2182 = vadd.f32 0.0, %v2181
      %v2183 = vpop.f32.mrf.mxu0
      %2184 = vmatprep.mubr.bf16.mxu0 0
      %2185 = vmatmul.mubr.bf16.gmra.mxu0 %v2115
      %v2186 = vpop.f32.mrf.mxu0
      %v2187 = vadd.f32 0.0, %v2186
      %v2188 = vpop.f32.mrf.mxu0
      %v2189 = vpop.f32.mrf.mxu0
      %v2190 = vadd.f32 0.0, %v2189
      %v2191 = vpop.f32.mrf.mxu0
      %2192 = vdwg.mxu0
      %v2193 = vadd.f32 %v2033, %v2155
      %v2194 = vadd.f32 %v2034, %v2158
      %v2195 = vadd.f32 %v2035, %v2163
      %v2196 = vadd.f32 %v2036, %v2166
      %v2197 = vadd.f32 %v2037, %v2171
      %v2198 = vadd.f32 %v2038, %v2174
      %v2199 = vadd.f32 %v2039, %v2179
      %v2200 = vadd.f32 %v2040, %v2182
      %v2201 = vadd.f32 %v2041, %v2187
      %v2202 = vadd.f32 %v2042, %v2190
      %v2203 = vld [vmem:[#allocation2 + $0x4] sm:$0xc]
      %s2204 = scalar_lea.vmem %s4, 20
      %v2205 = vld [vmem:[%s2204] sm:$0xf]
      %v2207 = vunpack.c.l.b16 %v2203
      %v2208 = vpack.c.b16 %v1915, %v2207
      %vm2209 = vcmask 1045504
      %v2210 = vrot.slane %v2208, 2
      %v2211 = vrot.slane %v1926, 2
      %v2212 = vsel %vm2209, %v2210, %v2211
      %v2213 = vrot.slane %v1927, 2
      %v2214 = vsel %vm2209, %v2211, %v2213
      %v2215 = vrot.slane %v1928, 2
      %v2216 = vsel %vm2209, %v2213, %v2215
      %v2217 = vrot.slane %v1929, 2
      %v2218 = vsel %vm2209, %v2215, %v2217
      %v2219 = vrot.slane %v2048, 2
      %v2220 = vsel %vm2209, %v2217, %v2219
      %v2222 = vsel %vm1593, %v2212, 0
      %v2225 = vsel %vm1593, %v2214, 0
      %v2228 = vsel %vm1593, %v2216, 0
      %v2231 = vsel %vm1593, %v2218, 0
      %v2234 = vsel %vm1593, %v2220, 0
      %v2237 = vsel %vm1609, %v2205, 0
      %2239 = vmatprep.subr.bf16.mxu0 0
      %2240 = vmatpush1.bf16.msra.mxu0 0
      %2241 = vmatprep.subr.bf16.mxu0 0
      %2242 = vmatpush1.bf16.msra.mxu0 0
      %2243 = vmatprep.subr.bf16.mxu0 0
      %2244 = vmatpush1.bf16.msra.mxu0 0
      %2245 = vmatprep.subr.bf16.mxu0 0
      %2246 = vmatpush1.bf16.msra.mxu0 0
      %2247 = vmatprep.subr.bf16.mxu0 0
      %2248 = vmatpush1.bf16.msra.mxu0 0
      %2249 = vmatprep.subr.bf16.mxu0 0
      %2250 = vmatpush1.bf16.msra.mxu0 0
      %2251 = vmatprep.subr.bf16.mxu0 0
      %2252 = vmatpush1.bf16.msra.mxu0 0
      %2253 = vmatprep.subr.bf16.mxu0 0
      %2254 = vmatpush1.bf16.msra.mxu0 %v2237
      %2255 = vmatprep.subr.bf16.mxu0 0
      %2256 = vmatpush2.bf16.msra.mxu0 0
      %2257 = vmatprep.subr.bf16.mxu0 0
      %2258 = vmatpush2.bf16.msra.mxu0 0
      %2259 = vmatprep.subr.bf16.mxu0 0
      %2260 = vmatpush2.bf16.msra.mxu0 0
      %2261 = vmatprep.subr.bf16.mxu0 0
      %2262 = vmatpush2.bf16.msra.mxu0 0
      %2263 = vmatprep.subr.bf16.mxu0 0
      %2264 = vmatpush2.bf16.msra.mxu0 0
      %2265 = vmatprep.subr.bf16.mxu0 0
      %2266 = vmatpush2.bf16.msra.mxu0 0
      %2267 = vmatprep.subr.bf16.mxu0 0
      %2268 = vmatpush2.bf16.msra.mxu0 0
      %2269 = vmatprep.subr.bf16.mxu0 0
      %2270 = vmatpush2.bf16.msra.mxu0 0
      %2271 = vmatprep.mubr.bf16.mxu0 0
      %2272 = vmatmul.mubr.bf16.gmra.mxu0 %v2222
      %v2273 = vpop.f32.mrf.mxu0
      %v2274 = vadd.f32 0.0, %v2273
      %v2275 = vpop.f32.mrf.mxu0
      %v2276 = vpop.f32.mrf.mxu0
      %v2277 = vadd.f32 0.0, %v2276
      %v2278 = vpop.f32.mrf.mxu0
      %2279 = vmatprep.mubr.bf16.mxu0 0
      %2280 = vmatmul.mubr.bf16.gmra.mxu0 %v2225
      %v2281 = vpop.f32.mrf.mxu0
      %v2282 = vadd.f32 0.0, %v2281
      %v2283 = vpop.f32.mrf.mxu0
      %v2284 = vpop.f32.mrf.mxu0
      %v2285 = vadd.f32 0.0, %v2284
      %v2286 = vpop.f32.mrf.mxu0
      %2287 = vmatprep.mubr.bf16.mxu0 0
      %2288 = vmatmul.mubr.bf16.gmra.mxu0 %v2228
      %v2289 = vpop.f32.mrf.mxu0
      %v2290 = vadd.f32 0.0, %v2289
      %v2291 = vpop.f32.mrf.mxu0
      %v2292 = vpop.f32.mrf.mxu0
      %v2293 = vadd.f32 0.0, %v2292
      %v2294 = vpop.f32.mrf.mxu0
      %2295 = vmatprep.mubr.bf16.mxu0 0
      %2296 = vmatmul.mubr.bf16.gmra.mxu0 %v2231
      %v2297 = vpop.f32.mrf.mxu0
      %v2298 = vadd.f32 0.0, %v2297
      %v2299 = vpop.f32.mrf.mxu0
      %v2300 = vpop.f32.mrf.mxu0
      %v2301 = vadd.f32 0.0, %v2300
      %v2302 = vpop.f32.mrf.mxu0
      %2303 = vmatprep.mubr.bf16.mxu0 0
      %2304 = vmatmul.mubr.bf16.gmra.mxu0 %v2234
      %v2305 = vpop.f32.mrf.mxu0
      %v2306 = vadd.f32 0.0, %v2305
      %v2307 = vpop.f32.mrf.mxu0
      %v2308 = vpop.f32.mrf.mxu0
      %v2309 = vadd.f32 0.0, %v2308
      %v2310 = vpop.f32.mrf.mxu0
      %2311 = vdwg.mxu0
      %v2312 = vadd.f32 %v2193, %v2274
      %v2313 = vadd.f32 %v2194, %v2277
      %v2314 = vadd.f32 %v2195, %v2282
      %v2315 = vadd.f32 %v2196, %v2285
      %v2316 = vadd.f32 %v2197, %v2290
      %v2317 = vadd.f32 %v2198, %v2293
      %v2318 = vadd.f32 %v2199, %v2298
      %v2319 = vadd.f32 %v2200, %v2301
      %v2320 = vadd.f32 %v2201, %v2306
      %v2321 = vadd.f32 %v2202, %v2309
      %v2322 = vld [vmem:[#allocation2 + $0x8] sm:$0xc]
      %v2323 = vld [vmem:[#allocation2 + $0xc] sm:$0xf]
      %v2324 = vld [vmem:[#allocation2 + $0x10] sm:$0xf]
      %v2325 = vld [vmem:[#allocation2 + $0x14] sm:$0xf]
      %v2326 = vld [vmem:[#allocation2 + $0x18] sm:$0xf]
      %v2327 = vld [vmem:[#allocation2 + $0x1c] sm:$0xf]
      %v2328 = vld [vmem:[#allocation2 + $0x20] sm:$0xf]
      %v2329 = vld [vmem:[#allocation2 + $0x24] sm:$0xf]
      %v2330 = vld [vmem:[#allocation2 + $0x28] sm:$0xf]
      %v2331 = vld [vmem:[#allocation2 + $0x2c] sm:$0xf]
      %v2332 = vld [vmem:[#allocation2 + $0x30] sm:$0x3]
      %s2333 = scalar_lea.vmem %s4, 24
      %v2334 = vld [vmem:[%s2333] sm:$0xf]
      %v2346 = vunpack.c.l.b16 %v2322
      %v2347 = vunpack.c.l.b16 %v2323
      %v2348 = vunpack.c.l.b16 %v2324
      %v2349 = vunpack.c.l.b16 %v2325
      %v2350 = vunpack.c.l.b16 %v2326
      %v2351 = vunpack.c.l.b16 %v2327
      %v2352 = vunpack.c.l.b16 %v2328
      %v2353 = vunpack.c.l.b16 %v2329
      %v2354 = vunpack.c.l.b16 %v2330
      %v2355 = vunpack.c.l.b16 %v2331
      %v2356 = vunpack.c.l.b16 %v2332
      %v2357 = vpack.c.b16 %v2347, %v2346
      %v2358 = vpack.c.b16 %v2349, %v2348
      %v2359 = vpack.c.b16 %v2351, %v2350
      %v2360 = vpack.c.b16 %v2353, %v2352
      %v2361 = vpack.c.b16 %v2355, %v2354
      %v2362 = vpack.c.b16 %v2356, %v2356
      %v2363 = vrot.slane %v2357, 2
      %v2364 = vrot.slane %v2358, 2
      %v2365 = vsel %vm2209, %v2363, %v2364
      %v2366 = vrot.slane %v2359, 2
      %v2367 = vsel %vm2209, %v2364, %v2366
      %v2368 = vrot.slane %v2360, 2
      %v2369 = vsel %vm2209, %v2366, %v2368
      %v2370 = vrot.slane %v2361, 2
      %v2371 = vsel %vm2209, %v2368, %v2370
      %v2372 = vrot.slane %v2362, 2
      %v2373 = vsel %vm2209, %v2370, %v2372
      %v2375 = vsel %vm1593, %v2365, 0
      %v2378 = vsel %vm1593, %v2367, 0
      %v2381 = vsel %vm1593, %v2369, 0
      %v2384 = vsel %vm1593, %v2371, 0
      %v2387 = vsel %vm1593, %v2373, 0
      %v2390 = vsel %vm1609, %v2334, 0
      %2392 = vmatprep.subr.bf16.mxu0 0
      %2393 = vmatpush1.bf16.msra.mxu0 0
      %2394 = vmatprep.subr.bf16.mxu0 0
      %2395 = vmatpush1.bf16.msra.mxu0 0
      %2396 = vmatprep.subr.bf16.mxu0 0
      %2397 = vmatpush1.bf16.msra.mxu0 0
      %2398 = vmatprep.subr.bf16.mxu0 0
      %2399 = vmatpush1.bf16.msra.mxu0 0
      %2400 = vmatprep.subr.bf16.mxu0 0
      %2401 = vmatpush1.bf16.msra.mxu0 0
      %2402 = vmatprep.subr.bf16.mxu0 0
      %2403 = vmatpush1.bf16.msra.mxu0 0
      %2404 = vmatprep.subr.bf16.mxu0 0
      %2405 = vmatpush1.bf16.msra.mxu0 0
      %2406 = vmatprep.subr.bf16.mxu0 0
      %2407 = vmatpush1.bf16.msra.mxu0 %v2390
      %2408 = vmatprep.subr.bf16.mxu0 0
      %2409 = vmatpush2.bf16.msra.mxu0 0
      %2410 = vmatprep.subr.bf16.mxu0 0
      %2411 = vmatpush2.bf16.msra.mxu0 0
      %2412 = vmatprep.subr.bf16.mxu0 0
      %2413 = vmatpush2.bf16.msra.mxu0 0
      %2414 = vmatprep.subr.bf16.mxu0 0
      %2415 = vmatpush2.bf16.msra.mxu0 0
      %2416 = vmatprep.subr.bf16.mxu0 0
      %2417 = vmatpush2.bf16.msra.mxu0 0
      %2418 = vmatprep.subr.bf16.mxu0 0
      %2419 = vmatpush2.bf16.msra.mxu0 0
      %2420 = vmatprep.subr.bf16.mxu0 0
      %2421 = vmatpush2.bf16.msra.mxu0 0
      %2422 = vmatprep.subr.bf16.mxu0 0
      %2423 = vmatpush2.bf16.msra.mxu0 0
      %2424 = vmatprep.mubr.bf16.mxu0 0
      %2425 = vmatmul.mubr.bf16.gmra.mxu0 %v2375
      %v2426 = vpop.f32.mrf.mxu0
      %v2427 = vadd.f32 0.0, %v2426
      %v2428 = vpop.f32.mrf.mxu0
      %v2429 = vpop.f32.mrf.mxu0
      %v2430 = vadd.f32 0.0, %v2429
      %v2431 = vpop.f32.mrf.mxu0
      %2432 = vmatprep.mubr.bf16.mxu0 0
      %2433 = vmatmul.mubr.bf16.gmra.mxu0 %v2378
      %v2434 = vpop.f32.mrf.mxu0
      %v2435 = vadd.f32 0.0, %v2434
      %v2436 = vpop.f32.mrf.mxu0
      %v2437 = vpop.f32.mrf.mxu0
      %v2438 = vadd.f32 0.0, %v2437
      %v2439 = vpop.f32.mrf.mxu0
      %2440 = vmatprep.mubr.bf16.mxu0 0
      %2441 = vmatmul.mubr.bf16.gmra.mxu0 %v2381
      %v2442 = vpop.f32.mrf.mxu0
      %v2443 = vadd.f32 0.0, %v2442
      %v2444 = vpop.f32.mrf.mxu0
      %v2445 = vpop.f32.mrf.mxu0
      %v2446 = vadd.f32 0.0, %v2445
      %v2447 = vpop.f32.mrf.mxu0
      %2448 = vmatprep.mubr.bf16.mxu0 0
      %2449 = vmatmul.mubr.bf16.gmra.mxu0 %v2384
      %v2450 = vpop.f32.mrf.mxu0
      %v2451 = vadd.f32 0.0, %v2450
      %v2452 = vpop.f32.mrf.mxu0
      %v2453 = vpop.f32.mrf.mxu0
      %v2454 = vadd.f32 0.0, %v2453
      %v2455 = vpop.f32.mrf.mxu0
      %2456 = vmatprep.mubr.bf16.mxu0 0
      %2457 = vmatmul.mubr.bf16.gmra.mxu0 %v2387
      %v2458 = vpop.f32.mrf.mxu0
      %v2459 = vadd.f32 0.0, %v2458
      %v2460 = vpop.f32.mrf.mxu0
      %v2461 = vpop.f32.mrf.mxu0
      %v2462 = vadd.f32 0.0, %v2461
      %v2463 = vpop.f32.mrf.mxu0
      %2464 = vdwg.mxu0
      %v2465 = vadd.f32 %v2312, %v2427
      %v2466 = vadd.f32 %v2313, %v2430
      %v2467 = vadd.f32 %v2314, %v2435
      %v2468 = vadd.f32 %v2315, %v2438
      %v2469 = vadd.f32 %v2316, %v2443
      %v2470 = vadd.f32 %v2317, %v2446
      %v2471 = vadd.f32 %v2318, %v2451
      %v2472 = vadd.f32 %v2319, %v2454
      %v2473 = vadd.f32 %v2320, %v2459
      %v2474 = vadd.f32 %v2321, %v2462
      %v2475 = vld [vmem:[#allocation2 + $0x30] sm:$0x7]
      %s2476 = scalar_lea.vmem %s4, 28
      %v2477 = vld [vmem:[%s2476] sm:$0xf]
      %v2479 = vunpack.c.l.b16 %v2475
      %v2480 = vpack.c.b16 %v2479, %v2479
      %vm2481 = vsmask.f32 5376
      %v2483 = vshrl.u32 %v2357, 16
      %v2485 = vrot.slane %v2483, 2
      %v2486 = vshll.u32 %v2357, 16
      %v2488 = vrot.slane %v2486, 3
      %v2489 = vor.u32 %v2485, %v2488
      %v2491 = vshrl.u32 %v2358, 16
      %v2493 = vrot.slane %v2491, 2
      %v2494 = vshll.u32 %v2358, 16
      %v2496 = vrot.slane %v2494, 3
      %v2497 = vor.u32 %v2493, %v2496
      %v2498 = vsel %vm2481, %v2489, %v2497
      %v2500 = vshrl.u32 %v2359, 16
      %v2502 = vrot.slane %v2500, 2
      %v2503 = vshll.u32 %v2359, 16
      %v2505 = vrot.slane %v2503, 3
      %v2506 = vor.u32 %v2502, %v2505
      %v2507 = vsel %vm2481, %v2497, %v2506
      %v2509 = vshrl.u32 %v2360, 16
      %v2511 = vrot.slane %v2509, 2
      %v2512 = vshll.u32 %v2360, 16
      %v2514 = vrot.slane %v2512, 3
      %v2515 = vor.u32 %v2511, %v2514
      %v2516 = vsel %vm2481, %v2506, %v2515
      %v2518 = vshrl.u32 %v2361, 16
      %v2520 = vrot.slane %v2518, 2
      %v2521 = vshll.u32 %v2361, 16
      %v2523 = vrot.slane %v2521, 3
      %v2524 = vor.u32 %v2520, %v2523
      %v2525 = vsel %vm2481, %v2515, %v2524
      %v2527 = vshrl.u32 %v2480, 16
      %v2529 = vrot.slane %v2527, 2
      %v2530 = vshll.u32 %v2480, 16
      %v2532 = vrot.slane %v2530, 3
      %v2533 = vor.u32 %v2529, %v2532
      %v2534 = vsel %vm2481, %v2524, %v2533
      %v2536 = vsel %vm1593, %v2498, 0
      %v2539 = vsel %vm1593, %v2507, 0
      %v2542 = vsel %vm1593, %v2516, 0
      %v2545 = vsel %vm1593, %v2525, 0
      %v2548 = vsel %vm1593, %v2534, 0
      %v2551 = vsel %vm1609, %v2477, 0
      %2553 = vmatprep.subr.bf16.mxu0 0
      %2554 = vmatpush1.bf16.msra.mxu0 0
      %2555 = vmatprep.subr.bf16.mxu0 0
      %2556 = vmatpush1.bf16.msra.mxu0 0
      %2557 = vmatprep.subr.bf16.mxu0 0
      %2558 = vmatpush1.bf16.msra.mxu0 0
      %2559 = vmatprep.subr.bf16.mxu0 0
      %2560 = vmatpush1.bf16.msra.mxu0 0
      %2561 = vmatprep.subr.bf16.mxu0 0
      %2562 = vmatpush1.bf16.msra.mxu0 0
      %2563 = vmatprep.subr.bf16.mxu0 0
      %2564 = vmatpush1.bf16.msra.mxu0 0
      %2565 = vmatprep.subr.bf16.mxu0 0
      %2566 = vmatpush1.bf16.msra.mxu0 0
      %2567 = vmatprep.subr.bf16.mxu0 0
      %2568 = vmatpush1.bf16.msra.mxu0 %v2551
      %2569 = vmatprep.subr.bf16.mxu0 0
      %2570 = vmatpush2.bf16.msra.mxu0 0
      %2571 = vmatprep.subr.bf16.mxu0 0
      %2572 = vmatpush2.bf16.msra.mxu0 0
      %2573 = vmatprep.subr.bf16.mxu0 0
      %2574 = vmatpush2.bf16.msra.mxu0 0
      %2575 = vmatprep.subr.bf16.mxu0 0
      %2576 = vmatpush2.bf16.msra.mxu0 0
      %2577 = vmatprep.subr.bf16.mxu0 0
      %2578 = vmatpush2.bf16.msra.mxu0 0
      %2579 = vmatprep.subr.bf16.mxu0 0
      %2580 = vmatpush2.bf16.msra.mxu0 0
      %2581 = vmatprep.subr.bf16.mxu0 0
      %2582 = vmatpush2.bf16.msra.mxu0 0
      %2583 = vmatprep.subr.bf16.mxu0 0
      %2584 = vmatpush2.bf16.msra.mxu0 0
      %2585 = vmatprep.mubr.bf16.mxu0 0
      %2586 = vmatmul.mubr.bf16.gmra.mxu0 %v2536
      %v2587 = vpop.f32.mrf.mxu0
      %v2588 = vadd.f32 0.0, %v2587
      %v2589 = vpop.f32.mrf.mxu0
      %v2590 = vpop.f32.mrf.mxu0
      %v2591 = vadd.f32 0.0, %v2590
      %v2592 = vpop.f32.mrf.mxu0
      %2593 = vmatprep.mubr.bf16.mxu0 0
      %2594 = vmatmul.mubr.bf16.gmra.mxu0 %v2539
      %v2595 = vpop.f32.mrf.mxu0
      %v2596 = vadd.f32 0.0, %v2595
      %v2597 = vpop.f32.mrf.mxu0
      %v2598 = vpop.f32.mrf.mxu0
      %v2599 = vadd.f32 0.0, %v2598
      %v2600 = vpop.f32.mrf.mxu0
      %2601 = vmatprep.mubr.bf16.mxu0 0
      %2602 = vmatmul.mubr.bf16.gmra.mxu0 %v2542
      %v2603 = vpop.f32.mrf.mxu0
      %v2604 = vadd.f32 0.0, %v2603
      %v2605 = vpop.f32.mrf.mxu0
      %v2606 = vpop.f32.mrf.mxu0
      %v2607 = vadd.f32 0.0, %v2606
      %v2608 = vpop.f32.mrf.mxu0
      %2609 = vmatprep.mubr.bf16.mxu0 0
      %2610 = vmatmul.mubr.bf16.gmra.mxu0 %v2545
      %v2611 = vpop.f32.mrf.mxu0
      %v2612 = vadd.f32 0.0, %v2611
      %v2613 = vpop.f32.mrf.mxu0
      %v2614 = vpop.f32.mrf.mxu0
      %v2615 = vadd.f32 0.0, %v2614
      %v2616 = vpop.f32.mrf.mxu0
      %2617 = vmatprep.mubr.bf16.mxu0 0
      %2618 = vmatmul.mubr.bf16.gmra.mxu0 %v2548
      %v2619 = vpop.f32.mrf.mxu0
      %v2620 = vadd.f32 0.0, %v2619
      %v2621 = vpop.f32.mrf.mxu0
      %v2622 = vpop.f32.mrf.mxu0
      %v2623 = vadd.f32 0.0, %v2622
      %v2624 = vpop.f32.mrf.mxu0
      %2625 = vdwg.mxu0
      %v2626 = vadd.f32 %v2465, %v2588
      %v2627 = vadd.f32 %v2466, %v2591
      %v2628 = vadd.f32 %v2467, %v2596
      %v2629 = vadd.f32 %v2468, %v2599
      %v2630 = vadd.f32 %v2469, %v2604
      %v2631 = vadd.f32 %v2470, %v2607
      %v2632 = vadd.f32 %v2471, %v2612
      %v2633 = vadd.f32 %v2472, %v2615
      %v2634 = vadd.f32 %v2473, %v2620
      %v2635 = vadd.f32 %v2474, %v2623
      %v2636 = vld [vmem:[#allocation2 + $0x8] sm:$0x8]
      %s2637 = scalar_lea.vmem %s4, 32
      %v2638 = vld [vmem:[%s2637] sm:$0xf]
      %v2640 = vunpack.c.l.b16 %v2636
      %v2641 = vpack.c.b16 %v2347, %v2640
      %vm2642 = vcmask 1044480
      %v2643 = vrot.slane %v2641, 3
      %v2644 = vrot.slane %v2358, 3
      %v2645 = vsel %vm2642, %v2643, %v2644
      %v2646 = vrot.slane %v2359, 3
      %v2647 = vsel %vm2642, %v2644, %v2646
      %v2648 = vrot.slane %v2360, 3
      %v2649 = vsel %vm2642, %v2646, %v2648
      %v2650 = vrot.slane %v2361, 3
      %v2651 = vsel %vm2642, %v2648, %v2650
      %v2652 = vrot.slane %v2480, 3
      %v2653 = vsel %vm2642, %v2650, %v2652
      %v2655 = vsel %vm1593, %v2645, 0
      %v2658 = vsel %vm1593, %v2647, 0
      %v2661 = vsel %vm1593, %v2649, 0
      %v2664 = vsel %vm1593, %v2651, 0
      %v2667 = vsel %vm1593, %v2653, 0
      %v2670 = vsel %vm1609, %v2638, 0
      %2672 = vmatprep.subr.bf16.mxu0 0
      %2673 = vmatpush1.bf16.msra.mxu0 0
      %2674 = vmatprep.subr.bf16.mxu0 0
      %2675 = vmatpush1.bf16.msra.mxu0 0
      %2676 = vmatprep.subr.bf16.mxu0 0
      %2677 = vmatpush1.bf16.msra.mxu0 0
      %2678 = vmatprep.subr.bf16.mxu0 0
      %2679 = vmatpush1.bf16.msra.mxu0 0
      %2680 = vmatprep.subr.bf16.mxu0 0
      %2681 = vmatpush1.bf16.msra.mxu0 0
      %2682 = vmatprep.subr.bf16.mxu0 0
      %2683 = vmatpush1.bf16.msra.mxu0 0
      %2684 = vmatprep.subr.bf16.mxu0 0
      %2685 = vmatpush1.bf16.msra.mxu0 0
      %2686 = vmatprep.subr.bf16.mxu0 0
      %2687 = vmatpush1.bf16.msra.mxu0 %v2670
      %2688 = vmatprep.subr.bf16.mxu0 0
      %2689 = vmatpush2.bf16.msra.mxu0 0
      %2690 = vmatprep.subr.bf16.mxu0 0
      %2691 = vmatpush2.bf16.msra.mxu0 0
      %2692 = vmatprep.subr.bf16.mxu0 0
      %2693 = vmatpush2.bf16.msra.mxu0 0
      %2694 = vmatprep.subr.bf16.mxu0 0
      %2695 = vmatpush2.bf16.msra.mxu0 0
      %2696 = vmatprep.subr.bf16.mxu0 0
      %2697 = vmatpush2.bf16.msra.mxu0 0
      %2698 = vmatprep.subr.bf16.mxu0 0
      %2699 = vmatpush2.bf16.msra.mxu0 0
      %2700 = vmatprep.subr.bf16.mxu0 0
      %2701 = vmatpush2.bf16.msra.mxu0 0
      %2702 = vmatprep.subr.bf16.mxu0 0
      %2703 = vmatpush2.bf16.msra.mxu0 0
      %2704 = vmatprep.mubr.bf16.mxu0 0
      %2705 = vmatmul.mubr.bf16.gmra.mxu0 %v2655
      %v2706 = vpop.f32.mrf.mxu0
      %v2707 = vadd.f32 0.0, %v2706
      %v2708 = vpop.f32.mrf.mxu0
      %v2709 = vpop.f32.mrf.mxu0
      %v2710 = vadd.f32 0.0, %v2709
      %v2711 = vpop.f32.mrf.mxu0
      %2712 = vmatprep.mubr.bf16.mxu0 0
      %2713 = vmatmul.mubr.bf16.gmra.mxu0 %v2658
      %v2714 = vpop.f32.mrf.mxu0
      %v2715 = vadd.f32 0.0, %v2714
      %v2716 = vpop.f32.mrf.mxu0
      %v2717 = vpop.f32.mrf.mxu0
      %v2718 = vadd.f32 0.0, %v2717
      %v2719 = vpop.f32.mrf.mxu0
      %2720 = vmatprep.mubr.bf16.mxu0 0
      %2721 = vmatmul.mubr.bf16.gmra.mxu0 %v2661
      %v2722 = vpop.f32.mrf.mxu0
      %v2723 = vadd.f32 0.0, %v2722
      %v2724 = vpop.f32.mrf.mxu0
      %v2725 = vpop.f32.mrf.mxu0
      %v2726 = vadd.f32 0.0, %v2725
      %v2727 = vpop.f32.mrf.mxu0
      %2728 = vmatprep.mubr.bf16.mxu0 0
      %2729 = vmatmul.mubr.bf16.gmra.mxu0 %v2664
      %v2730 = vpop.f32.mrf.mxu0
      %v2731 = vadd.f32 0.0, %v2730
      %v2732 = vpop.f32.mrf.mxu0
      %v2733 = vpop.f32.mrf.mxu0
      %v2734 = vadd.f32 0.0, %v2733
      %v2735 = vpop.f32.mrf.mxu0
      %2736 = vmatprep.mubr.bf16.mxu0 0
      %2737 = vmatmul.mubr.bf16.gmra.mxu0 %v2667
      %v2738 = vpop.f32.mrf.mxu0
      %v2739 = vadd.f32 0.0, %v2738
      %v2740 = vpop.f32.mrf.mxu0
      %v2741 = vpop.f32.mrf.mxu0
      %v2742 = vadd.f32 0.0, %v2741
      %v2743 = vpop.f32.mrf.mxu0
      %2744 = vdwg.mxu0
      %v2745 = vadd.f32 %v2626, %v2707
      %v2746 = vadd.f32 %v2627, %v2710
      %v2747 = vadd.f32 %v2628, %v2715
      %v2748 = vadd.f32 %v2629, %v2718
      %v2749 = vadd.f32 %v2630, %v2723
      %v2750 = vadd.f32 %v2631, %v2726
      %v2751 = vadd.f32 %v2632, %v2731
      %v2752 = vadd.f32 %v2633, %v2734
      %v2753 = vadd.f32 %v2634, %v2739
      %v2754 = vadd.f32 %v2635, %v2742
      %v2755 = vld [vmem:[%s5] sm:$0x1]
      %v2757 = vlaneseq
      %v2758 = vshrl.u32 %v2757, 7
      %v2759 = vsub.s32 0, %v2758
      %v2760 = vrot.slane %v2755, %v2759
      %v2762 = vmul.f32 %v2745, %v2760
      %v2763 = vmul.f32 %v2746, %v2760
      %v2764 = vmul.f32 %v2747, %v2760
      %v2765 = vmul.f32 %v2748, %v2760
      %v2766 = vmul.f32 %v2749, %v2760
      %v2767 = vmul.f32 %v2750, %v2760
      %v2768 = vmul.f32 %v2751, %v2760
      %v2769 = vmul.f32 %v2752, %v2760
      %v2770 = vmul.f32 %v2753, %v2760
      %v2771 = vmul.f32 %v2754, %v2760
      %v2772 = vld [vmem:[%s6] sm:$0x1]
      %v2774 = vlaneseq
      %v2775 = vshrl.u32 %v2774, 7
      %v2776 = vsub.s32 0, %v2775
      %v2777 = vrot.slane %v2772, %v2776
      %v2779 = vadd.f32 %v2762, %v2777
      %v2780 = vadd.f32 %v2763, %v2777
      %v2781 = vadd.f32 %v2764, %v2777
      %v2782 = vadd.f32 %v2765, %v2777
      %v2783 = vadd.f32 %v2766, %v2777
      %v2784 = vadd.f32 %v2767, %v2777
      %v2785 = vadd.f32 %v2768, %v2777
      %v2786 = vadd.f32 %v2769, %v2777
      %v2787 = vadd.f32 %v2770, %v2777
      %v2788 = vadd.f32 %v2771, %v2777
      %v2789 = vadd.f32 %v2779, %v1325
      %v2790 = vadd.f32 %v2780, %v1326
      %v2791 = vadd.f32 %v2781, %v1327
      %v2792 = vadd.f32 %v2782, %v1328
      %v2793 = vadd.f32 %v2783, %v1329
      %v2794 = vadd.f32 %v2784, %v1330
      %v2795 = vadd.f32 %v2785, %v1331
      %v2796 = vadd.f32 %v2786, %v1332
      %v2797 = vadd.f32 %v2787, %v1333
      %v2798 = vadd.f32 %v2788, %v1334
      %v2799 = vmax.f32 %v2789, 0.0
      %v2800 = vmax.f32 %v2790, 0.0
      %v2801 = vmax.f32 %v2791, 0.0
      %v2802 = vmax.f32 %v2792, 0.0
      %v2803 = vmax.f32 %v2793, 0.0
      %v2804 = vmax.f32 %v2794, 0.0
      %v2805 = vmax.f32 %v2795, 0.0
      %v2806 = vmax.f32 %v2796, 0.0
      %v2807 = vmax.f32 %v2797, 0.0
      %v2808 = vmax.f32 %v2798, 0.0
      %2809 = vst.msk [vmem:[%s359] sm:$0xff] %vm1593, %v2799
      %2810 = vst.msk [vmem:[%s359 + $0x8] sm:$0xff] %vm1593, %v2800
      %2811 = vst.msk [vmem:[%s359 + $0x10] sm:$0xff] %vm1593, %v2801
      %2812 = vst.msk [vmem:[%s359 + $0x18] sm:$0xff] %vm1593, %v2802
      %2813 = vst.msk [vmem:[%s359 + $0x20] sm:$0xff] %vm1593, %v2803
      %2814 = vst.msk [vmem:[%s359 + $0x28] sm:$0xff] %vm1593, %v2804
      %2815 = vst.msk [vmem:[%s359 + $0x30] sm:$0xff] %vm1593, %v2805
      %2816 = vst.msk [vmem:[%s359 + $0x38] sm:$0xff] %vm1593, %v2806
      %2817 = vst.msk [vmem:[%s359 + $0x40] sm:$0xff] %vm1593, %v2807
      %2818 = vst.msk [vmem:[%s359 + $0x48] sm:$0xff] %vm1593, %v2808
      %p2819 = scmp.lt.s32.totalorder %s21, 1
      %s2820 = scalar_select %p2819, %s21, 1
      %s2821 = smul.addr %s2820, 10
      %s2822 = smul.addr %s2821, 8
      %s2823 = scalar_lea.vmem %s10, %s2822
      // Predicated region
      $region61: #{basic_block_forward.1} parent=59 // pred_check
        %p2824 = pneg %p254
      $region62: #{basic_block_forward.1} parent=59 // pred_check_branch
        %2826 = sbr.rel (%p2824) target = $region64
      $region63: #{basic_block_forward.1} parent=59 // pred_region
        _
      $region64: #{basic_block_forward.1} parent=59 // pred_fallthru
        _
    $region60: #{basic_block_forward.1} parent=5 // pred_fallthru
      _
    %p2827 = scmp.le.s32.totalorder 2, %s16
    // Predicated region
    $region65: #{basic_block_forward.1} parent=5 // pred_check
      %p2828 = pneg %p2827
    $region66: #{basic_block_forward.1} parent=5 // pred_check_branch
      %2830 = sbr.rel (%p2828) target = $region68
    $region67: #{basic_block_forward.1} parent=5 // pred_region
      %s2831 = ssub.s32 %s16, 2
      // Predicated region
      $region69: #{basic_block_forward.1} parent=67 // pred_check
        %p2832 = pneg %p260
      $region70: #{basic_block_forward.1} parent=67 // pred_check_branch
        %2834 = sbr.rel (%p2832) target = $region72
      $region71: #{basic_block_forward.1} parent=67 // pred_region
        %p2835 = scmp.lt.s32.totalorder %s22, 1
        %s2836 = scalar_select %p2835, %s22, 1
        %s2837 = smul.addr %s2836, 10
        %s2838 = smul.addr %s2837, 8
        %s2839 = scalar_lea.vmem %s10, %s2838
      $region72: #{basic_block_forward.1} parent=67 // pred_fallthru
        _
    $region68: #{basic_block_forward.1} parent=5 // pred_fallthru
      _
  $region6: #{basic_block_forward.1} parent=0 // loop_footer
    %s20 = sadd.s32 1, %s16
  $region7: #{basic_block_forward.1} parent=0 // loop_footer_branch
    %15 = sbr.rel target = $region3
  $region8: #{basic_block_forward.1} parent=0 // loop_exit
    _

</llo_original>
